<compile_context>
chip_gen: v5e
topology: v5e:2x2
jax: 0.10.0
libtpu: 0.0.40
codegen_flags: <defaults>
</compile_context>

<pallas_src>
import jax
import jax.numpy as jnp
from jax.experimental import pallas as pl
from jax.experimental.pallas import tpu as pltpu


def _iwt_kernel(x_ref, o_ref):
    """One grid step handles a (4, Ct, Ht, W) window of the stacked sub-bands.

    x_ref : (4, Ct, Ht, W)   VMEM tile; leading axis = wavelet sub-band.
    o_ref : (Ct, Ht, 4*W)    VMEM tile; lanes [0, 2W) hold the even output
            rows, lanes [2W, 4W) the odd output rows.  The (H,4W)->(2H,2W)
            row interleave is a free row-major reshape done in the wrapper.
    """
    _, ct, ht, w = x_ref.shape
    f32 = jnp.float32

    x1 = x_ref[0].astype(f32)
    x2 = x_ref[1].astype(f32)
    x3 = x_ref[2].astype(f32)
    x4 = x_ref[3].astype(f32)

    # Butterfly with the 1/2 scaling folded in (4 mul + 8 add/sub total).
    s14 = (x1 + x4) * 0.5
    d14 = (x1 - x4) * 0.5
    s23 = (x2 + x3) * 0.5
    d23 = (x2 - x3) * 0.5

    # Even output rows: [a c a c ...]  (a = out[2h,2w], c = out[2h,2w+1])
    a = s14 - s23
    c = d14 + d23
    top = jnp.stack([a, c], axis=-1).reshape(ct, ht, 2 * w)
    o_ref[:, :, 0:2 * w] = top.astype(o_ref.dtype)

    # Odd output rows: [b d b d ...]  (b = out[2h+1,2w], d = out[2h+1,2w+1])
    b = d14 - d23
    d = s14 + s23
    bot = jnp.stack([b, d], axis=-1).reshape(ct, ht, 2 * w)
    o_ref[:, :, 2 * w:4 * w] = bot.astype(o_ref.dtype)


def _divisors(n):
    return [d for d in range(1, n + 1) if n % d == 0]


def _tile_footprint_bytes(ct, ht, w, in_itemsize):
    """Double-buffered VMEM footprint for one grid step."""
    in_bytes = 4 * ct * ht * w * in_itemsize       # 4 sub-bands
    out_bytes = ct * ht * (4 * w) * 4              # f32 output tile
    return 2 * (in_bytes + out_bytes)              # x2 for double buffering


def _pick_tiles(cout, h, w, in_itemsize, vmem_budget_bytes):
    """Choose (Ct, Ht) for the (B, Cout//Ct, H//Ht) grid.

    Preference order: full-height slabs (Ht == H, contiguous H*W DMA bursts
    per channel) with the largest Ct that fits the budget; only split H (to
    divisors that respect the per-dtype sublane quantum) when even Ct == 1 at
    full height exceeds the budget.
    """
    q = max(8, 32 // max(1, in_itemsize))          # sublane quantum per dtype
    h_splits = sorted([d for d in _divisors(h) if d % q == 0 and d != h],
                      reverse=True)
    h_cands = [h] + h_splits
    c_cands = sorted(_divisors(cout), reverse=True)

    for ht in h_cands:
        for ct in c_cands:
            if _tile_footprint_bytes(ct, ht, w, in_itemsize) <= vmem_budget_bytes:
                return ct, ht

    # Nothing fits the budget: fall back to the smallest legal tile and let
    # the caller bump vmem_limit_bytes accordingly.
    ht = min([d for d in _divisors(h) if d % q == 0] or [h])
    return 1, ht


def rwt_forward(x, *, vmem_budget_bytes=32 * 1024 * 1024,
                vmem_limit_bytes=48 * 1024 * 1024):
    """Pallas implementation of RWT.forward (iwt_init).  Returns float32."""
    B, C, H, W = x.shape
    assert C % 4 == 0, "input channels must be divisible by 4"
    Cout = C // 4

    in_itemsize = jnp.dtype(x.dtype).itemsize
    Ct, Ht = _pick_tiles(Cout, H, W, in_itemsize, vmem_budget_bytes)
    nC = Cout // Ct
    nH = H // Ht
    grid = (B, nC, nH)   # fully independent -> all "parallel" (megacore-able)

    footprint = _tile_footprint_bytes(Ct, Ht, W, in_itemsize)
    vmem_limit = max(vmem_limit_bytes, footprint + (2 << 20))

    # Free contiguous view: channel k*Cout + j of x  <->  x5[:, k, j].
    x5 = x.reshape(B, 4, Cout, H, W)

    in_spec = pl.BlockSpec((None, 4, Ct, Ht, W),
                           lambda b, c, h: (b, 0, c, h, 0))
    out_spec = pl.BlockSpec((None, Ct, Ht, 4 * W),
                            lambda b, c, h: (b, c, h, 0))

    out_numel = B * Cout * (2 * H) * (2 * W)
    cost = pl.CostEstimate(
        flops=3 * out_numel,                       # 12 ops per 4 outputs
        transcendentals=0,
        bytes_accessed=x.size * in_itemsize + out_numel * 4,
    )

    out = pl.pallas_call(
        _iwt_kernel,
        out_shape=jax.ShapeDtypeStruct((B, Cout, H, 4 * W), jnp.float32),
        grid_spec=pltpu.PrefetchScalarGridSpec(
            num_scalar_prefetch=0,
            grid=grid,
            in_specs=[in_spec],
            out_specs=out_spec,
        ),
        compiler_params=pltpu.CompilerParams(
            dimension_semantics=("parallel", "parallel", "parallel"),
            vmem_limit_bytes=vmem_limit,
        ),
        cost_estimate=cost,
    )(x5)

    # Free row-major view: (..., H, 4W) -> (..., 2H, 2W).  Lanes [0, 2W) of
    # row h become output row 2h and lanes [2W, 4W) become row 2h+1, i.e. the
    # height interleave costs nothing.
    return out.reshape(B, Cout, 2 * H, 2 * W)


def rwt_reference(x):
    """Pure-JAX reference mirroring iwt_init semantics exactly (f32 output)."""
    x = x.astype(jnp.float32)
    B, C, H, W = x.shape
    Cout = C // 4
    x1 = x[:, 0 * Cout:1 * Cout] / 2
    x2 = x[:, 1 * Cout:2 * Cout] / 2
    x3 = x[:, 2 * Cout:3 * Cout] / 2
    x4 = x[:, 3 * Cout:4 * Cout] / 2
    h = jnp.zeros((B, Cout, 2 * H, 2 * W), dtype=jnp.float32)
    h = h.at[:, :, 0::2, 0::2].set(x1 - x2 - x3 + x4)
    h = h.at[:, :, 1::2, 0::2].set(x1 - x2 + x3 - x4)
    h = h.at[:, :, 0::2, 1::2].set(x1 + x2 - x3 - x4)
    h = h.at[:, :, 1::2, 1::2].set(x1 + x2 + x3 + x4)
    return h


if __name__ == "__main__":
    k0, k1 = jax.random.split(jax.random.PRNGKey(0))

    # Small shapes consistent with the module (C divisible by 4).
    B, C, H, W = 2, 4, 16, 16
    x = jax.random.normal(k0, (B, C, H, W), dtype=jnp.float32)

    out = jax.block_until_ready(rwt_forward(x))
    ref = rwt_reference(x)
    assert out.shape == (B, C // 4, 2 * H, 2 * W), out.shape
    assert out.dtype == jnp.float32, out.dtype
    assert jnp.allclose(out, ref, atol=1e-5, rtol=1e-5), "mismatch vs reference"

    # Exercise the tiled (B, Cout-chunks, H-chunks) grid path (tiny VMEM
    # budget forces channel + row tiling -> 8 grid steps) and the
    # bf16-input -> f32-output semantics.
    x2 = jax.random.normal(k1, (2, 8, 32, 32), dtype=jnp.bfloat16)
    out2 = jax.block_until_ready(rwt_forward(x2, vmem_budget_bytes=16 * 1024))
    ref2 = rwt_reference(x2)
    assert out2.shape == (2, 2, 64, 64), out2.shape
    assert out2.dtype == jnp.float32, out2.dtype
    assert jnp.allclose(out2, ref2, atol=1e-5, rtol=1e-5), "tiled-path mismatch"

    print("KERNEL_OK")
</pallas_src>

<mosaic_0001>
module attributes {stable_mosaic.version = 11 : i64} {
  func.func @_iwt_kernel(%arg0: i32, %arg1: i32, %arg2: i32, %arg3: memref<1x4x1x16x16xf32, #tpu.memory_space<vmem>>, %arg4: memref<1x1x16x64xf32, #tpu.memory_space<vmem>>) attributes {dimension_semantics = [#tpu.dimension_semantics<parallel>, #tpu.dimension_semantics<parallel>, #tpu.dimension_semantics<parallel>], iteration_bounds = array<i64: 2, 1, 1>, scalar_prefetch = 0 : i64, scratch_operands = 0 : i64, tpu.core_type = #tpu.core_type<tc>, window_params = [{transform_indices = @transform_0, window_bounds = array<i64: 1, 4, 1, 16, 16>}, {transform_indices = @transform_1, window_bounds = array<i64: 1, 1, 16, 64>}]} {
    %c0 = arith.constant 0 : index
    %c0_0 = arith.constant 0 : index
    %c0_1 = arith.constant 0 : index
    %c0_2 = arith.constant 0 : index
    %c0_3 = arith.constant 0 : index
    %0 = vector.load %arg3[%c0, %c0_0, %c0_1, %c0_2, %c0_3] : memref<1x4x1x16x16xf32, #tpu.memory_space<vmem>>, vector<1x1x1x16x16xf32>
    %1 = vector.shape_cast %0 : vector<1x1x1x16x16xf32> to vector<1x16x16xf32>
    %c0_4 = arith.constant 0 : index
    %c1 = arith.constant 1 : index
    %c0_5 = arith.constant 0 : index
    %c0_6 = arith.constant 0 : index
    %c0_7 = arith.constant 0 : index
    %2 = vector.load %arg3[%c0_4, %c1, %c0_5, %c0_6, %c0_7] : memref<1x4x1x16x16xf32, #tpu.memory_space<vmem>>, vector<1x1x1x16x16xf32>
    %3 = vector.shape_cast %2 : vector<1x1x1x16x16xf32> to vector<1x16x16xf32>
    %c0_8 = arith.constant 0 : index
    %c2 = arith.constant 2 : index
    %c0_9 = arith.constant 0 : index
    %c0_10 = arith.constant 0 : index
    %c0_11 = arith.constant 0 : index
    %4 = vector.load %arg3[%c0_8, %c2, %c0_9, %c0_10, %c0_11] : memref<1x4x1x16x16xf32, #tpu.memory_space<vmem>>, vector<1x1x1x16x16xf32>
    %5 = vector.shape_cast %4 : vector<1x1x1x16x16xf32> to vector<1x16x16xf32>
    %c0_12 = arith.constant 0 : index
    %c3 = arith.constant 3 : index
    %c0_13 = arith.constant 0 : index
    %c0_14 = arith.constant 0 : index
    %c0_15 = arith.constant 0 : index
    %6 = vector.load %arg3[%c0_12, %c3, %c0_13, %c0_14, %c0_15] : memref<1x4x1x16x16xf32, #tpu.memory_space<vmem>>, vector<1x1x1x16x16xf32>
    %7 = vector.shape_cast %6 : vector<1x1x1x16x16xf32> to vector<1x16x16xf32>
    %8 = arith.addf %1, %7 : vector<1x16x16xf32>
    %cst = arith.constant 5.000000e-01 : f32
    %9 = vector.broadcast %cst : f32 to vector<1x16x16xf32>
    %10 = arith.mulf %8, %9 : vector<1x16x16xf32>
    %11 = arith.subf %1, %7 : vector<1x16x16xf32>
    %cst_16 = arith.constant 5.000000e-01 : f32
    %12 = vector.broadcast %cst_16 : f32 to vector<1x16x16xf32>
    %13 = arith.mulf %11, %12 : vector<1x16x16xf32>
    %14 = arith.addf %3, %5 : vector<1x16x16xf32>
    %cst_17 = arith.constant 5.000000e-01 : f32
    %15 = vector.broadcast %cst_17 : f32 to vector<1x16x16xf32>
    %16 = arith.mulf %14, %15 : vector<1x16x16xf32>
    %17 = arith.subf %3, %5 : vector<1x16x16xf32>
    %cst_18 = arith.constant 5.000000e-01 : f32
    %18 = vector.broadcast %cst_18 : f32 to vector<1x16x16xf32>
    %19 = arith.mulf %17, %18 : vector<1x16x16xf32>
    %20 = arith.subf %10, %16 : vector<1x16x16xf32>
    %21 = arith.addf %13, %19 : vector<1x16x16xf32>
    %22 = vector.shape_cast %20 : vector<1x16x16xf32> to vector<1x16x16x1xf32>
    %23 = vector.shape_cast %21 : vector<1x16x16xf32> to vector<1x16x16x1xf32>
    %24 = tpu.concatenate %22, %23 in 3 : vector<1x16x16x1xf32>, vector<1x16x16x1xf32> -> vector<1x16x16x2xf32>
    %25 = vector.shape_cast %24 : vector<1x16x16x2xf32> to vector<1x16x32xf32>
    %c0_19 = arith.constant 0 : index
    %c0_20 = arith.constant 0 : index
    %c0_21 = arith.constant 0 : index
    %c0_22 = arith.constant 0 : index
    %26 = vector.load %arg4[%c0_19, %c0_20, %c0_21, %c0_22] : memref<1x1x16x64xf32, #tpu.memory_space<vmem>>, vector<1x1x16x32xf32>
    %27 = vector.shape_cast %26 : vector<1x1x16x32xf32> to vector<1x16x32xf32>
    %28 = vector.shape_cast %25 : vector<1x16x32xf32> to vector<1x1x16x32xf32>
    tpu.vector_store %arg4[%c0_19, %c0_20, %c0_21, %c0_22], %28 {strides = array<i32>} : memref<1x1x16x64xf32, #tpu.memory_space<vmem>>, vector<1x1x16x32xf32>,
    %29 = arith.subf %13, %19 : vector<1x16x16xf32>
    %30 = arith.addf %10, %16 : vector<1x16x16xf32>
    %31 = vector.shape_cast %29 : vector<1x16x16xf32> to vector<1x16x16x1xf32>
    %32 = vector.shape_cast %30 : vector<1x16x16xf32> to vector<1x16x16x1xf32>
    %33 = tpu.concatenate %31, %32 in 3 : vector<1x16x16x1xf32>, vector<1x16x16x1xf32> -> vector<1x16x16x2xf32>
    %34 = vector.shape_cast %33 : vector<1x16x16x2xf32> to vector<1x16x32xf32>
    %c0_23 = arith.constant 0 : index
    %c0_24 = arith.constant 0 : index
    %c0_25 = arith.constant 0 : index
    %c32 = arith.constant 32 : index
    %35 = vector.load %arg4[%c0_23, %c0_24, %c0_25, %c32] : memref<1x1x16x64xf32, #tpu.memory_space<vmem>>, vector<1x1x16x32xf32>
    %36 = vector.shape_cast %35 : vector<1x1x16x32xf32> to vector<1x16x32xf32>
    %37 = vector.shape_cast %34 : vector<1x16x32xf32> to vector<1x1x16x32xf32>
    tpu.vector_store %arg4[%c0_23, %c0_24, %c0_25, %c32], %37 {strides = array<i32>} : memref<1x1x16x64xf32, #tpu.memory_space<vmem>>, vector<1x1x16x32xf32>,
    return
  }
  func.func @transform_0(%arg0: i32, %arg1: i32, %arg2: i32) -> (i32, i32, i32, i32, i32) {
    %c0_i32 = arith.constant 0 : i32
    %c0_i32_0 = arith.constant 0 : i32
    %c0_i32_1 = arith.constant 0 : i32
    return %arg0, %c0_i32, %arg1, %arg2, %c0_i32_0 : i32, i32, i32, i32, i32
  }
  func.func @transform_1(%arg0: i32, %arg1: i32, %arg2: i32) -> (i32, i32, i32, i32) {
    %c0_i32 = arith.constant 0 : i32
    %c0_i32_0 = arith.constant 0 : i32
    return %arg0, %arg1, %arg2, %c0_i32 : i32, i32, i32, i32
  }
}

</mosaic_0001>

<llo_original>
// kernel: tpu_custom_call.1
$region0: #{tpu_custom_call.1}
  #allocation0 [shape = 'u32[]', space=smem, size = 0x4, offset = 0x4, fixed_abs, tag = 'smem constant byte address 0x4 - core index']
  #allocation1 [shape = 'u32[72,128]{1,0:T(1,128)}', space=vmem, size = 0x9000, scoped, tag = 'internal scratch']
  %s0 = inlined_call_operand.hbm [shape: f32[2,4,1,16,16], index: 0, kind: input, shape index: {}]
  %s1 = inlined_call_operand.hbm [shape: f32[2,1,16,64], index: 1, kind: output, shape index: {}]
  %s2 = sld [smem:[#allocation0]]
  $region41: #{tpu_custom_call.1} parent=0
    _
  %s4 = ssub.s32 1, %s2
  %s5 = scalar_select 0, %s4, %s2
  $region1: #{tpu_custom_call.1} parent=0
    #allocation2 [shape = 'u8[65536]{0}', space=vmem, size = 0x10000, scoped, tag = 'input window, operand 0']
    #allocation3 [shape = 's32[2]{0}', space=sflag, size = 0x8, scoped, tag = 'scoped memory for tpu_custom_call.1']
    #allocation4 [shape = 's32[2]{0}', space=sflag, size = 0x8, scoped, tag = 'scoped memory for tpu_custom_call.1']
    #allocation5 [shape = 'u8[16384]{0}', space=vmem, size = 0x4000, scoped, tag = 'output window, operand 0']
    %6 = vsyncpa [#allocation3], 0
    %s7 = scalar_lea.sflag [#allocation3], 1
    %8 = vsyncpa %s7, 0
    %9 = vsyncpa [#allocation4], 0
    %s10 = scalar_lea.sflag [#allocation4], 1
    %11 = vsyncpa %s10, 0
    loop: start=0, step=1, limit=4
    $region2: #{tpu_custom_call.1} parent=1 // loop_pre_header
      _
    $region3: #{tpu_custom_call.1} parent=1 // loop_header
      %s13 = sphi 0, %s17
      %p14 = scmp.ge.s32.totalorder %s13, 4
      %s20 = sphi 0, %s39
      %s21 = sphi 0, %s35
      %s22 = sphi 0, %s31
      %s23 = sphi 0, %s20
      %s24 = sphi 0, %s21
      %s25 = sphi 0, %s22
      %s26 = sphi 0, %s23
      %s27 = sphi 0, %s24
      %s28 = sphi 0, %s25
      %s46 = sphi 0, %s48
      %s49 = sphi 0, %s46
      %s50 = sphi 0, %s49
      %s66 = sphi 0, %s50
      %s76 = sphi 0, %s78
      %s79 = sphi 0, %s76
      %s80 = sphi 0, %s79
      %s96 = sphi 0, %s80
    $region4: #{tpu_custom_call.1} parent=1 // loop_header_branch
      %16 = sbr.rel (%p14) target = $region8
    $region5: #{tpu_custom_call.1} parent=1 // loop_body
      %s18 = ssub.s32 %s13, 1
      %s19 = ssub.s32 %s13, 2
      %s29 = sadd.s32 1, %s22
      %p30 = scmp.ge.s32.totalorder %s29, 1
      %s31 = scalar_select %p30, 0, %s29
      %s32 = sadd.s32 1, %s21
      %s33 = scalar_select %p30, %s32, %s21
      %p34 = scmp.ge.s32.totalorder %s33, 1
      %s35 = scalar_select %p34, 0, %s33
      %s36 = sadd.s32 1, %s20
      %s37 = scalar_select %p34, %s36, %s20
      %p38 = scmp.ge.s32.totalorder %s37, 2
      %s39 = scalar_select %p38, 0, %s37
      %s40 = ssub.s32 %s20, %s39
      %s41 = ssub.s32 %s21, %s35
      %s42 = sor.u32 %s40, %s41
      %s43 = ssub.s32 %s22, %s31
      %s44 = sor.u32 %s42, %s43
      %p45 = scmp.eq.s32.totalorder %s44, 0
      %s47 = sadd.s32 %s46, 1
      %s48 = scalar_select %p45, %s46, %s47
      %p51 = pneg %p45
      %p52 = scmp.eq.s32.totalorder %s13, 1
      %p53 = por %p51, %p52
      %p54 = scmp.ne.s32.totalorder %s46, %s49
      %p55 = scmp.eq.s32.totalorder %s13, 0
      %p56 = por %p54, %p55
      %p57 = scmp.ne.s32.totalorder %s46, %s49
      %p58 = scmp.eq.s32.totalorder %s18, 1
      %p59 = por %p57, %p58
      %p60 = scmp.ne.s32.totalorder %s49, %s50
      %p61 = scmp.eq.s32.totalorder %s18, 0
      %p62 = por %p60, %p61
      %p63 = scmp.ne.s32.totalorder %s49, %s50
      %p64 = scmp.eq.s32.totalorder %s19, 1
      %p65 = por %p63, %p64
      %p67 = scmp.ne.s32.totalorder %s50, %s66
      %p68 = scmp.eq.s32.totalorder %s19, 0
      %p69 = por %p67, %p68
      %s70 = ssub.s32 %s20, %s39
      %s71 = ssub.s32 %s21, %s35
      %s72 = sor.u32 %s70, %s71
      %s73 = ssub.s32 %s22, %s31
      %s74 = sor.u32 %s72, %s73
      %p75 = scmp.eq.s32.totalorder %s74, 0
      %s77 = sadd.s32 %s76, 1
      %s78 = scalar_select %p75, %s76, %s77
      %p81 = pneg %p75
      %p82 = scmp.eq.s32.totalorder %s13, 1
      %p83 = por %p81, %p82
      %p84 = scmp.ne.s32.totalorder %s76, %s79
      %p85 = scmp.eq.s32.totalorder %s13, 0
      %p86 = por %p84, %p85
      %p87 = scmp.ne.s32.totalorder %s76, %s79
      %p88 = scmp.eq.s32.totalorder %s18, 1
      %p89 = por %p87, %p88
      %p90 = scmp.ne.s32.totalorder %s79, %s80
      %p91 = scmp.eq.s32.totalorder %s18, 0
      %p92 = por %p90, %p91
      %p93 = scmp.ne.s32.totalorder %s79, %s80
      %p94 = scmp.eq.s32.totalorder %s19, 1
      %p95 = por %p93, %p94
      %p97 = scmp.ne.s32.totalorder %s80, %s96
      %p98 = scmp.eq.s32.totalorder %s19, 0
      %p99 = por %p97, %p98
      %p100 = scmp.le.s32.totalorder 1, %s13
      %p101 = scmp.lt.s32.totalorder %s13, 3
      %p102 = pnand %p100, %p101
      %p103 = pneg %p102
      // Predicated region
      $region9: #{tpu_custom_call.1} parent=5 // pred_check
        _
      $region10: #{tpu_custom_call.1} parent=5 // pred_check_branch
        %105 = sbr.rel (%p102) target = $region12
      $region11: #{tpu_custom_call.1} parent=5 // pred_region
        %s106 = ssub.s32 %s13, 1
      $region12: #{tpu_custom_call.1} parent=5 // pred_fallthru
        _
      %p107 = scmp.lt.s32.totalorder %s13, 2
      // Predicated region
      $region13: #{tpu_custom_call.1} parent=5 // pred_check
        %p108 = pneg %p107
      $region14: #{tpu_custom_call.1} parent=5 // pred_check_branch
        %110 = sbr.rel (%p108) target = $region16
      $region15: #{tpu_custom_call.1} parent=5 // pred_region
        // Predicated region
        $region17: #{tpu_custom_call.1} parent=15 // pred_check
          %p111 = pneg %p56
        $region18: #{tpu_custom_call.1} parent=15 // pred_check_branch
          %113 = sbr.rel (%p111) target = $region20
        $region19: #{tpu_custom_call.1} parent=15 // pred_region
          %s114 = sand.u32 %s46, 1
          %s115 = scalar_lea.sflag [#allocation3], %s114
          %s116 = sand.u32 %s46, 1
          %s117 = smul.addr %s116, 64
          %s118 = scalar_lea.vmem [#allocation2], %s117
          %s119 = smul.u32 2, %s22
          %121 = vsyncadd %s115, 0
          %s122 = smul.addr %s21, 2
          %s123 = sadd.s32 %s119, %s122
          %s124 = smul.addr %s20, 8
          %s125 = sadd.s32 %s123, %s124
          %s126 = smul.addr %s125, 8
          %s127 = scalar_lea.hbm %s0, %s126
          %s128 = sshll.u32 %s127, 4
          %s129 = int_to_ptr.hbm [resolvable:$true] %s128
          %s130 = sshll.u32 %s118, 4
          %s131 = int_to_ptr.vmem [resolvable:$true] %s130
          %136 = dma.hbm_to_vmem [thread:$0]  %s129, 1024, %s131, %s115, 128, 128, 8
        $region20: #{tpu_custom_call.1} parent=15 // pred_fallthru
          _
      $region16: #{tpu_custom_call.1} parent=5 // pred_fallthru
        _
      %p137 = scmp.le.s32.totalorder 1, %s13
      %p138 = scmp.lt.s32.totalorder %s13, 3
      %p139 = pnand %p137, %p138
      %p140 = pneg %p139
      // Predicated region
      $region21: #{tpu_custom_call.1} parent=5 // pred_check
        _
      $region22: #{tpu_custom_call.1} parent=5 // pred_check_branch
        %142 = sbr.rel (%p139) target = $region24
      $region23: #{tpu_custom_call.1} parent=5 // pred_region
        %s143 = ssub.s32 %s13, 1
        %s144 = sand.u32 %s49, 1
        %s145 = scalar_lea.sflag [#allocation3], %s144
        %s146 = sand.u32 %s49, 1
        %s147 = smul.addr %s146, 64
        %s148 = scalar_lea.vmem [#allocation2], %s147
        // Predicated region
        $region25: #{tpu_custom_call.1} parent=23 // pred_check
          %p149 = pneg %p62
        $region26: #{tpu_custom_call.1} parent=23 // pred_check_branch
          %151 = sbr.rel (%p149) target = $region28
        $region27: #{tpu_custom_call.1} parent=23 // pred_region
          %153 = dma.done %s145, 1024
        $region28: #{tpu_custom_call.1} parent=23 // pred_fallthru
          _
        %s154 = sand.u32 %s49, 1
        %s155 = scalar_lea.sflag [#allocation3], %s154
        %s156 = sand.u32 %s49, 1
        %s157 = smul.addr %s156, 64
        %s158 = scalar_lea.vmem [#allocation2], %s157
        %p159 = pneg %p62
        %p160 = pneg %p59
        %p161 = pneg %p92
        %p162 = pneg %p89
        %s163 = sand.u32 %s79, 1
        %s164 = scalar_lea.sflag [#allocation4], %s163
        %s165 = sand.u32 %s79, 1
        %s166 = smul.addr %s165, 16
        %s167 = scalar_lea.vmem [#allocation5], %s166
        %s168 = smul.u32 2, %s25
        %s169 = smul.u32 2, %s25
        %v170 = vld [vmem:[%s148] sm:$0xff]
        %v171 = vld [vmem:[%s148 + $0x8] sm:$0xff]
        %s172 = scalar_lea.vmem %s148, 16 [#allocation2]
        %v173 = vld [vmem:[%s172] sm:$0xff]
        %v174 = vld [vmem:[%s172 + $0x8] sm:$0xff]
        %s175 = scalar_lea.vmem %s148, 32 [#allocation2]
        %v176 = vld [vmem:[%s175] sm:$0xff]
        %v177 = vld [vmem:[%s175 + $0x8] sm:$0xff]
        %s178 = scalar_lea.vmem %s148, 48 [#allocation2]
        %v179 = vld [vmem:[%s178] sm:$0xff]
        %v180 = vld [vmem:[%s178 + $0x8] sm:$0xff]
        %v181 = vadd.f32 %v170, %v179
        %v182 = vadd.f32 %v171, %v180
        %v183 = vmul.f32 %v181, 0.5
        %v184 = vmul.f32 %v182, 0.5
        %v185 = vsub.f32 %v170, %v179
        %v186 = vsub.f32 %v171, %v180
        %v187 = vmul.f32 %v185, 0.5
        %v188 = vmul.f32 %v186, 0.5
        %v189 = vadd.f32 %v173, %v176
        %v190 = vadd.f32 %v174, %v177
        %v191 = vmul.f32 %v189, 0.5
        %v192 = vmul.f32 %v190, 0.5
        %v193 = vsub.f32 %v173, %v176
        %v194 = vsub.f32 %v174, %v177
        %v195 = vmul.f32 %v193, 0.5
        %v196 = vmul.f32 %v194, 0.5
        %v197 = vsub.f32 %v183, %v191
        %v198 = vsub.f32 %v184, %v192
        %v199 = vadd.f32 %v187, %v195
        %v200 = vadd.f32 %v188, %v196
        %v201 = vperm.slane %v197, 0
        %v202 = vlaneseq
        %v203 = vshrl.u32 %v202, 7
        %205 = vset.pattern.permute.xlu0 %v203
        %206 = vperm.xlu0 %205, %v201
        %v207 = vpop.permute.xlu0 %206
        %v208 = vlaneseq
        %v209 = vshrl.u32 %v208, 7
        %v210 = vadd.s32 %v209, 8
        %211 = vset.pattern.permute.xlu0 %v210
        %212 = vperm.xlu0 %211, %v201
        %v213 = vpop.permute.xlu0 %212
        %v214 = vperm.slane %v197, 1
        %v215 = vlaneseq
        %v216 = vshrl.u32 %v215, 7
        %218 = vset.pattern.permute.xlu0 %v216
        %219 = vperm.xlu0 %218, %v214
        %v220 = vpop.permute.xlu0 %219
        %v221 = vlaneseq
        %v222 = vshrl.u32 %v221, 7
        %v223 = vadd.s32 %v222, 8
        %224 = vset.pattern.permute.xlu0 %v223
        %225 = vperm.xlu0 %224, %v214
        %v226 = vpop.permute.xlu0 %225
        %v227 = vperm.slane %v197, 2
        %v228 = vlaneseq
        %v229 = vshrl.u32 %v228, 7
        %231 = vset.pattern.permute.xlu0 %v229
        %232 = vperm.xlu0 %231, %v227
        %v233 = vpop.permute.xlu0 %232
        %v234 = vlaneseq
        %v235 = vshrl.u32 %v234, 7
        %v236 = vadd.s32 %v235, 8
        %237 = vset.pattern.permute.xlu0 %v236
        %238 = vperm.xlu0 %237, %v227
        %v239 = vpop.permute.xlu0 %238
        %v240 = vperm.slane %v197, 3
        %v241 = vlaneseq
        %v242 = vshrl.u32 %v241, 7
        %244 = vset.pattern.permute.xlu0 %v242
        %245 = vperm.xlu0 %244, %v240
        %v246 = vpop.permute.xlu0 %245
        %v247 = vlaneseq
        %v248 = vshrl.u32 %v247, 7
        %v249 = vadd.s32 %v248, 8
        %250 = vset.pattern.permute.xlu0 %v249
        %251 = vperm.xlu0 %250, %v240
        %v252 = vpop.permute.xlu0 %251
        %v253 = vperm.slane %v197, 4
        %v254 = vlaneseq
        %v255 = vshrl.u32 %v254, 7
        %257 = vset.pattern.permute.xlu0 %v255
        %258 = vperm.xlu0 %257, %v253
        %v259 = vpop.permute.xlu0 %258
        %v260 = vlaneseq
        %v261 = vshrl.u32 %v260, 7
        %v262 = vadd.s32 %v261, 8
        %263 = vset.pattern.permute.xlu0 %v262
        %264 = vperm.xlu0 %263, %v253
        %v265 = vpop.permute.xlu0 %264
        %v266 = vperm.slane %v197, 5
        %v267 = vlaneseq
        %v268 = vshrl.u32 %v267, 7
        %270 = vset.pattern.permute.xlu0 %v268
        %271 = vperm.xlu0 %270, %v266
        %v272 = vpop.permute.xlu0 %271
        %v273 = vlaneseq
        %v274 = vshrl.u32 %v273, 7
        %v275 = vadd.s32 %v274, 8
        %276 = vset.pattern.permute.xlu0 %v275
        %277 = vperm.xlu0 %276, %v266
        %v278 = vpop.permute.xlu0 %277
        %v279 = vperm.slane %v197, 6
        %v280 = vlaneseq
        %v281 = vshrl.u32 %v280, 7
        %283 = vset.pattern.permute.xlu0 %v281
        %284 = vperm.xlu0 %283, %v279
        %v285 = vpop.permute.xlu0 %284
        %v286 = vlaneseq
        %v287 = vshrl.u32 %v286, 7
        %v288 = vadd.s32 %v287, 8
        %289 = vset.pattern.permute.xlu0 %v288
        %290 = vperm.xlu0 %289, %v279
        %v291 = vpop.permute.xlu0 %290
        %v292 = vperm.slane %v197, 7
        %v293 = vlaneseq
        %v294 = vshrl.u32 %v293, 7
        %296 = vset.pattern.permute.xlu0 %v294
        %297 = vperm.xlu0 %296, %v292
        %v298 = vpop.permute.xlu0 %297
        %v299 = vlaneseq
        %v300 = vshrl.u32 %v299, 7
        %v301 = vadd.s32 %v300, 8
        %302 = vset.pattern.permute.xlu0 %v301
        %303 = vperm.xlu0 %302, %v292
        %v304 = vpop.permute.xlu0 %303
        %v305 = vperm.slane %v198, 0
        %v306 = vlaneseq
        %v307 = vshrl.u32 %v306, 7
        %309 = vset.pattern.permute.xlu0 %v307
        %310 = vperm.xlu0 %309, %v305
        %v311 = vpop.permute.xlu0 %310
        %v312 = vlaneseq
        %v313 = vshrl.u32 %v312, 7
        %v314 = vadd.s32 %v313, 8
        %315 = vset.pattern.permute.xlu0 %v314
        %316 = vperm.xlu0 %315, %v305
        %v317 = vpop.permute.xlu0 %316
        %v318 = vperm.slane %v198, 1
        %v319 = vlaneseq
        %v320 = vshrl.u32 %v319, 7
        %322 = vset.pattern.permute.xlu0 %v320
        %323 = vperm.xlu0 %322, %v318
        %v324 = vpop.permute.xlu0 %323
        %v325 = vlaneseq
        %v326 = vshrl.u32 %v325, 7
        %v327 = vadd.s32 %v326, 8
        %328 = vset.pattern.permute.xlu0 %v327
        %329 = vperm.xlu0 %328, %v318
        %v330 = vpop.permute.xlu0 %329
        %v331 = vperm.slane %v198, 2
        %v332 = vlaneseq
        %v333 = vshrl.u32 %v332, 7
        %335 = vset.pattern.permute.xlu0 %v333
        %336 = vperm.xlu0 %335, %v331
        %v337 = vpop.permute.xlu0 %336
        %v338 = vlaneseq
        %v339 = vshrl.u32 %v338, 7
        %v340 = vadd.s32 %v339, 8
        %341 = vset.pattern.permute.xlu0 %v340
        %342 = vperm.xlu0 %341, %v331
        %v343 = vpop.permute.xlu0 %342
        %v344 = vperm.slane %v198, 3
        %v345 = vlaneseq
        %v346 = vshrl.u32 %v345, 7
        %348 = vset.pattern.permute.xlu0 %v346
        %349 = vperm.xlu0 %348, %v344
        %v350 = vpop.permute.xlu0 %349
        %v351 = vlaneseq
        %v352 = vshrl.u32 %v351, 7
        %v353 = vadd.s32 %v352, 8
        %354 = vset.pattern.permute.xlu0 %v353
        %355 = vperm.xlu0 %354, %v344
        %v356 = vpop.permute.xlu0 %355
        %v357 = vperm.slane %v198, 4
        %v358 = vlaneseq
        %v359 = vshrl.u32 %v358, 7
        %361 = vset.pattern.permute.xlu0 %v359
        %362 = vperm.xlu0 %361, %v357
        %v363 = vpop.permute.xlu0 %362
        %v364 = vlaneseq
        %v365 = vshrl.u32 %v364, 7
        %v366 = vadd.s32 %v365, 8
        %367 = vset.pattern.permute.xlu0 %v366
        %368 = vperm.xlu0 %367, %v357
        %v369 = vpop.permute.xlu0 %368
        %v370 = vperm.slane %v198, 5
        %v371 = vlaneseq
        %v372 = vshrl.u32 %v371, 7
        %374 = vset.pattern.permute.xlu0 %v372
        %375 = vperm.xlu0 %374, %v370
        %v376 = vpop.permute.xlu0 %375
        %v377 = vlaneseq
        %v378 = vshrl.u32 %v377, 7
        %v379 = vadd.s32 %v378, 8
        %380 = vset.pattern.permute.xlu0 %v379
        %381 = vperm.xlu0 %380, %v370
        %v382 = vpop.permute.xlu0 %381
        %v383 = vperm.slane %v198, 6
        %v384 = vlaneseq
        %v385 = vshrl.u32 %v384, 7
        %387 = vset.pattern.permute.xlu0 %v385
        %388 = vperm.xlu0 %387, %v383
        %v389 = vpop.permute.xlu0 %388
        %v390 = vlaneseq
        %v391 = vshrl.u32 %v390, 7
        %v392 = vadd.s32 %v391, 8
        %393 = vset.pattern.permute.xlu0 %v392
        %394 = vperm.xlu0 %393, %v383
        %v395 = vpop.permute.xlu0 %394
        %v396 = vperm.slane %v198, 7
        %v397 = vlaneseq
        %v398 = vshrl.u32 %v397, 7
        %400 = vset.pattern.permute.xlu0 %v398
        %401 = vperm.xlu0 %400, %v396
        %v402 = vpop.permute.xlu0 %401
        %v403 = vlaneseq
        %v404 = vshrl.u32 %v403, 7
        %v405 = vadd.s32 %v404, 8
        %406 = vset.pattern.permute.xlu0 %v405
        %407 = vperm.xlu0 %406, %v396
        %v408 = vpop.permute.xlu0 %407
        %v409 = vperm.slane %v199, 0
        %v410 = vlaneseq
        %v411 = vshrl.u32 %v410, 7
        %413 = vset.pattern.permute.xlu0 %v411
        %414 = vperm.xlu0 %413, %v409
        %v415 = vpop.permute.xlu0 %414
        %v416 = vlaneseq
        %v417 = vshrl.u32 %v416, 7
        %v418 = vadd.s32 %v417, 8
        %419 = vset.pattern.permute.xlu0 %v418
        %420 = vperm.xlu0 %419, %v409
        %v421 = vpop.permute.xlu0 %420
        %v422 = vperm.slane %v199, 1
        %v423 = vlaneseq
        %v424 = vshrl.u32 %v423, 7
        %426 = vset.pattern.permute.xlu0 %v424
        %427 = vperm.xlu0 %426, %v422
        %v428 = vpop.permute.xlu0 %427
        %v429 = vlaneseq
        %v430 = vshrl.u32 %v429, 7
        %v431 = vadd.s32 %v430, 8
        %432 = vset.pattern.permute.xlu0 %v431
        %433 = vperm.xlu0 %432, %v422
        %v434 = vpop.permute.xlu0 %433
        %v435 = vperm.slane %v199, 2
        %v436 = vlaneseq
        %v437 = vshrl.u32 %v436, 7
        %439 = vset.pattern.permute.xlu0 %v437
        %440 = vperm.xlu0 %439, %v435
        %v441 = vpop.permute.xlu0 %440
        %v442 = vlaneseq
        %v443 = vshrl.u32 %v442, 7
        %v444 = vadd.s32 %v443, 8
        %445 = vset.pattern.permute.xlu0 %v444
        %446 = vperm.xlu0 %445, %v435
        %v447 = vpop.permute.xlu0 %446
        %v448 = vperm.slane %v199, 3
        %v449 = vlaneseq
        %v450 = vshrl.u32 %v449, 7
        %452 = vset.pattern.permute.xlu0 %v450
        %453 = vperm.xlu0 %452, %v448
        %v454 = vpop.permute.xlu0 %453
        %v455 = vlaneseq
        %v456 = vshrl.u32 %v455, 7
        %v457 = vadd.s32 %v456, 8
        %458 = vset.pattern.permute.xlu0 %v457
        %459 = vperm.xlu0 %458, %v448
        %v460 = vpop.permute.xlu0 %459
        %v461 = vperm.slane %v199, 4
        %v462 = vlaneseq
        %v463 = vshrl.u32 %v462, 7
        %465 = vset.pattern.permute.xlu0 %v463
        %466 = vperm.xlu0 %465, %v461
        %v467 = vpop.permute.xlu0 %466
        %v468 = vlaneseq
        %v469 = vshrl.u32 %v468, 7
        %v470 = vadd.s32 %v469, 8
        %471 = vset.pattern.permute.xlu0 %v470
        %472 = vperm.xlu0 %471, %v461
        %v473 = vpop.permute.xlu0 %472
        %v474 = vperm.slane %v199, 5
        %v475 = vlaneseq
        %v476 = vshrl.u32 %v475, 7
        %478 = vset.pattern.permute.xlu0 %v476
        %479 = vperm.xlu0 %478, %v474
        %v480 = vpop.permute.xlu0 %479
        %v481 = vlaneseq
        %v482 = vshrl.u32 %v481, 7
        %v483 = vadd.s32 %v482, 8
        %484 = vset.pattern.permute.xlu0 %v483
        %485 = vperm.xlu0 %484, %v474
        %v486 = vpop.permute.xlu0 %485
        %v487 = vperm.slane %v199, 6
        %v488 = vlaneseq
        %v489 = vshrl.u32 %v488, 7
        %491 = vset.pattern.permute.xlu0 %v489
        %492 = vperm.xlu0 %491, %v487
        %v493 = vpop.permute.xlu0 %492
        %v494 = vlaneseq
        %v495 = vshrl.u32 %v494, 7
        %v496 = vadd.s32 %v495, 8
        %497 = vset.pattern.permute.xlu0 %v496
        %498 = vperm.xlu0 %497, %v487
        %v499 = vpop.permute.xlu0 %498
        %v500 = vperm.slane %v199, 7
        %v501 = vlaneseq
        %v502 = vshrl.u32 %v501, 7
        %504 = vset.pattern.permute.xlu0 %v502
        %505 = vperm.xlu0 %504, %v500
        %v506 = vpop.permute.xlu0 %505
        %v507 = vlaneseq
        %v508 = vshrl.u32 %v507, 7
        %v509 = vadd.s32 %v508, 8
        %510 = vset.pattern.permute.xlu0 %v509
        %511 = vperm.xlu0 %510, %v500
        %v512 = vpop.permute.xlu0 %511
        %v513 = vperm.slane %v200, 0
        %v514 = vlaneseq
        %v515 = vshrl.u32 %v514, 7
        %517 = vset.pattern.permute.xlu0 %v515
        %518 = vperm.xlu0 %517, %v513
        %v519 = vpop.permute.xlu0 %518
        %v520 = vlaneseq
        %v521 = vshrl.u32 %v520, 7
        %v522 = vadd.s32 %v521, 8
        %523 = vset.pattern.permute.xlu0 %v522
        %524 = vperm.xlu0 %523, %v513
        %v525 = vpop.permute.xlu0 %524
        %v526 = vperm.slane %v200, 1
        %v527 = vlaneseq
        %v528 = vshrl.u32 %v527, 7
        %530 = vset.pattern.permute.xlu0 %v528
        %531 = vperm.xlu0 %530, %v526
        %v532 = vpop.permute.xlu0 %531
        %v533 = vlaneseq
        %v534 = vshrl.u32 %v533, 7
        %v535 = vadd.s32 %v534, 8
        %536 = vset.pattern.permute.xlu0 %v535
        %537 = vperm.xlu0 %536, %v526
        %v538 = vpop.permute.xlu0 %537
        %v539 = vperm.slane %v200, 2
        %v540 = vlaneseq
        %v541 = vshrl.u32 %v540, 7
        %543 = vset.pattern.permute.xlu0 %v541
        %544 = vperm.xlu0 %543, %v539
        %v545 = vpop.permute.xlu0 %544
        %v546 = vlaneseq
        %v547 = vshrl.u32 %v546, 7
        %v548 = vadd.s32 %v547, 8
        %549 = vset.pattern.permute.xlu0 %v548
        %550 = vperm.xlu0 %549, %v539
        %v551 = vpop.permute.xlu0 %550
        %v552 = vperm.slane %v200, 3
        %v553 = vlaneseq
        %v554 = vshrl.u32 %v553, 7
        %556 = vset.pattern.permute.xlu0 %v554
        %557 = vperm.xlu0 %556, %v552
        %v558 = vpop.permute.xlu0 %557
        %v559 = vlaneseq
        %v560 = vshrl.u32 %v559, 7
        %v561 = vadd.s32 %v560, 8
        %562 = vset.pattern.permute.xlu0 %v561
        %563 = vperm.xlu0 %562, %v552
        %v564 = vpop.permute.xlu0 %563
        %v565 = vperm.slane %v200, 4
        %v566 = vlaneseq
        %v567 = vshrl.u32 %v566, 7
        %569 = vset.pattern.permute.xlu0 %v567
        %570 = vperm.xlu0 %569, %v565
        %v571 = vpop.permute.xlu0 %570
        %v572 = vlaneseq
        %v573 = vshrl.u32 %v572, 7
        %v574 = vadd.s32 %v573, 8
        %575 = vset.pattern.permute.xlu0 %v574
        %576 = vperm.xlu0 %575, %v565
        %v577 = vpop.permute.xlu0 %576
        %v578 = vperm.slane %v200, 5
        %v579 = vlaneseq
        %v580 = vshrl.u32 %v579, 7
        %582 = vset.pattern.permute.xlu0 %v580
        %583 = vperm.xlu0 %582, %v578
        %v584 = vpop.permute.xlu0 %583
        %v585 = vlaneseq
        %v586 = vshrl.u32 %v585, 7
        %v587 = vadd.s32 %v586, 8
        %588 = vset.pattern.permute.xlu0 %v587
        %589 = vperm.xlu0 %588, %v578
        %v590 = vpop.permute.xlu0 %589
        %v591 = vperm.slane %v200, 6
        %v592 = vlaneseq
        %v593 = vshrl.u32 %v592, 7
        %595 = vset.pattern.permute.xlu0 %v593
        %596 = vperm.xlu0 %595, %v591
        %v597 = vpop.permute.xlu0 %596
        %v598 = vlaneseq
        %v599 = vshrl.u32 %v598, 7
        %v600 = vadd.s32 %v599, 8
        %601 = vset.pattern.permute.xlu0 %v600
        %602 = vperm.xlu0 %601, %v591
        %v603 = vpop.permute.xlu0 %602
        %v604 = vperm.slane %v200, 7
        %v605 = vlaneseq
        %v606 = vshrl.u32 %v605, 7
        %608 = vset.pattern.permute.xlu0 %v606
        %609 = vperm.xlu0 %608, %v604
        %v610 = vpop.permute.xlu0 %609
        %v611 = vlaneseq
        %v612 = vshrl.u32 %v611, 7
        %v613 = vadd.s32 %v612, 8
        %614 = vset.pattern.permute.xlu0 %v613
        %615 = vperm.xlu0 %614, %v604
        %v616 = vpop.permute.xlu0 %615
        %vm617 = vcmask 7168
        %v618 = vsel %vm617, %v207, %v415
        %v619 = vsel %vm617, %v213, %v421
        %v620 = vsel %vm617, %v220, %v428
        %v621 = vsel %vm617, %v226, %v434
        %v622 = vsel %vm617, %v233, %v441
        %v623 = vsel %vm617, %v239, %v447
        %v624 = vsel %vm617, %v246, %v454
        %v625 = vsel %vm617, %v252, %v460
        %v626 = vsel %vm617, %v259, %v467
        %v627 = vsel %vm617, %v265, %v473
        %v628 = vsel %vm617, %v272, %v480
        %v629 = vsel %vm617, %v278, %v486
        %v630 = vsel %vm617, %v285, %v493
        %v631 = vsel %vm617, %v291, %v499
        %v632 = vsel %vm617, %v298, %v506
        %v633 = vsel %vm617, %v304, %v512
        %v634 = vsel %vm617, %v311, %v519
        %v635 = vsel %vm617, %v317, %v525
        %v636 = vsel %vm617, %v324, %v532
        %v637 = vsel %vm617, %v330, %v538
        %v638 = vsel %vm617, %v337, %v545
        %v639 = vsel %vm617, %v343, %v551
        %v640 = vsel %vm617, %v350, %v558
        %v641 = vsel %vm617, %v356, %v564
        %v642 = vsel %vm617, %v363, %v571
        %v643 = vsel %vm617, %v369, %v577
        %v644 = vsel %vm617, %v376, %v584
        %v645 = vsel %vm617, %v382, %v590
        %v646 = vsel %vm617, %v389, %v597
        %v647 = vsel %vm617, %v395, %v603
        %v648 = vsel %vm617, %v402, %v610
        %v649 = vsel %vm617, %v408, %v616
        %v650 = vrot.slane %v622, 4
        %vm651 = vcmask 1047556
        %v652 = vsel %vm651, %v650, %v618
        %v653 = vrot.slane %v618, 4
        %v654 = vsel %vm651, %v622, %v653
        %v656 = vunpack.c.l.s4 1983009808
        %v657 = vunpack.c.0.s8 %v656
        %v658 = vperm.slane %v652, %v657
        %v660 = vunpack.c.l.s4 1983009808
        %v661 = vunpack.c.0.s8 %v660
        %v662 = vperm.slane %v654, %v661
        %v663 = vrot.slane %v624, 4
        %v664 = vsel %vm651, %v663, %v620
        %v665 = vrot.slane %v620, 4
        %v666 = vsel %vm651, %v624, %v665
        %v668 = vunpack.c.l.s4 1983009808
        %v669 = vunpack.c.0.s8 %v668
        %v670 = vperm.slane %v664, %v669
        %v672 = vunpack.c.l.s4 1983009808
        %v673 = vunpack.c.0.s8 %v672
        %v674 = vperm.slane %v666, %v673
        %v675 = vrot.slane %v630, 4
        %v676 = vsel %vm651, %v675, %v626
        %v677 = vrot.slane %v626, 4
        %v678 = vsel %vm651, %v630, %v677
        %v680 = vunpack.c.l.s4 1983009808
        %v681 = vunpack.c.0.s8 %v680
        %v682 = vperm.slane %v676, %v681
        %v684 = vunpack.c.l.s4 1983009808
        %v685 = vunpack.c.0.s8 %v684
        %v686 = vperm.slane %v678, %v685
        %v687 = vrot.slane %v632, 4
        %v688 = vsel %vm651, %v687, %v628
        %v689 = vrot.slane %v628, 4
        %v690 = vsel %vm651, %v632, %v689
        %v692 = vunpack.c.l.s4 1983009808
        %v693 = vunpack.c.0.s8 %v692
        %v694 = vperm.slane %v688, %v693
        %v696 = vunpack.c.l.s4 1983009808
        %v697 = vunpack.c.0.s8 %v696
        %v698 = vperm.slane %v690, %v697
        %v699 = vrot.slane %v670, 4
        %v700 = vsel %vm651, %v699, %v658
        %v701 = vrot.slane %v658, 4
        %v702 = vsel %vm651, %v670, %v701
        %v704 = vunpack.c.l.s4 1934713408
        %v705 = vunpack.c.0.s8 %v704
        %v706 = vperm.slane %v700, %v705
        %v708 = vunpack.c.l.s4 1934713408
        %v709 = vunpack.c.0.s8 %v708
        %v710 = vperm.slane %v702, %v709
        %v711 = vrot.slane %v674, 4
        %v712 = vsel %vm651, %v711, %v662
        %v713 = vrot.slane %v662, 4
        %v714 = vsel %vm651, %v674, %v713
        %v716 = vunpack.c.l.s4 1934713408
        %v717 = vunpack.c.0.s8 %v716
        %v718 = vperm.slane %v712, %v717
        %v720 = vunpack.c.l.s4 1934713408
        %v721 = vunpack.c.0.s8 %v720
        %v722 = vperm.slane %v714, %v721
        %v723 = vrot.slane %v694, 4
        %v724 = vsel %vm651, %v723, %v682
        %v725 = vrot.slane %v682, 4
        %v726 = vsel %vm651, %v694, %v725
        %v728 = vunpack.c.l.s4 1934713408
        %v729 = vunpack.c.0.s8 %v728
        %v730 = vperm.slane %v724, %v729
        %v732 = vunpack.c.l.s4 1934713408
        %v733 = vunpack.c.0.s8 %v732
        %v734 = vperm.slane %v726, %v733
        %v735 = vrot.slane %v698, 4
        %v736 = vsel %vm651, %v735, %v686
        %v737 = vrot.slane %v686, 4
        %v738 = vsel %vm651, %v698, %v737
        %v740 = vunpack.c.l.s4 1934713408
        %v741 = vunpack.c.0.s8 %v740
        %v742 = vperm.slane %v736, %v741
        %v744 = vunpack.c.l.s4 1934713408
        %v745 = vunpack.c.0.s8 %v744
        %v746 = vperm.slane %v738, %v745
        %v747 = vrot.slane %v730, 4
        %v748 = vsel %vm651, %v747, %v706
        %v749 = vrot.slane %v706, 4
        %v750 = vsel %vm651, %v730, %v749
        %v751 = vrot.slane %v734, 4
        %v752 = vsel %vm651, %v751, %v710
        %v753 = vrot.slane %v710, 4
        %v754 = vsel %vm651, %v734, %v753
        %v755 = vrot.slane %v742, 4
        %v756 = vsel %vm651, %v755, %v718
        %v757 = vrot.slane %v718, 4
        %v758 = vsel %vm651, %v742, %v757
        %v759 = vrot.slane %v746, 4
        %v760 = vsel %vm651, %v759, %v722
        %v761 = vrot.slane %v722, 4
        %v762 = vsel %vm651, %v746, %v761
        %v763 = vrot.slane %v638, 4
        %v764 = vsel %vm651, %v763, %v634
        %v765 = vrot.slane %v634, 4
        %v766 = vsel %vm651, %v638, %v765
        %v768 = vunpack.c.l.s4 1983009808
        %v769 = vunpack.c.0.s8 %v768
        %v770 = vperm.slane %v764, %v769
        %v772 = vunpack.c.l.s4 1983009808
        %v773 = vunpack.c.0.s8 %v772
        %v774 = vperm.slane %v766, %v773
        %v775 = vrot.slane %v640, 4
        %v776 = vsel %vm651, %v775, %v636
        %v777 = vrot.slane %v636, 4
        %v778 = vsel %vm651, %v640, %v777
        %v780 = vunpack.c.l.s4 1983009808
        %v781 = vunpack.c.0.s8 %v780
        %v782 = vperm.slane %v776, %v781
        %v784 = vunpack.c.l.s4 1983009808
        %v785 = vunpack.c.0.s8 %v784
        %v786 = vperm.slane %v778, %v785
        %v787 = vrot.slane %v646, 4
        %v788 = vsel %vm651, %v787, %v642
        %v789 = vrot.slane %v642, 4
        %v790 = vsel %vm651, %v646, %v789
        %v792 = vunpack.c.l.s4 1983009808
        %v793 = vunpack.c.0.s8 %v792
        %v794 = vperm.slane %v788, %v793
        %v796 = vunpack.c.l.s4 1983009808
        %v797 = vunpack.c.0.s8 %v796
        %v798 = vperm.slane %v790, %v797
        %v799 = vrot.slane %v648, 4
        %v800 = vsel %vm651, %v799, %v644
        %v801 = vrot.slane %v644, 4
        %v802 = vsel %vm651, %v648, %v801
        %v804 = vunpack.c.l.s4 1983009808
        %v805 = vunpack.c.0.s8 %v804
        %v806 = vperm.slane %v800, %v805
        %v808 = vunpack.c.l.s4 1983009808
        %v809 = vunpack.c.0.s8 %v808
        %v810 = vperm.slane %v802, %v809
        %v811 = vrot.slane %v782, 4
        %v812 = vsel %vm651, %v811, %v770
        %v813 = vrot.slane %v770, 4
        %v814 = vsel %vm651, %v782, %v813
        %v816 = vunpack.c.l.s4 1934713408
        %v817 = vunpack.c.0.s8 %v816
        %v818 = vperm.slane %v812, %v817
        %v820 = vunpack.c.l.s4 1934713408
        %v821 = vunpack.c.0.s8 %v820
        %v822 = vperm.slane %v814, %v821
        %v823 = vrot.slane %v786, 4
        %v824 = vsel %vm651, %v823, %v774
        %v825 = vrot.slane %v774, 4
        %v826 = vsel %vm651, %v786, %v825
        %v828 = vunpack.c.l.s4 1934713408
        %v829 = vunpack.c.0.s8 %v828
        %v830 = vperm.slane %v824, %v829
        %v832 = vunpack.c.l.s4 1934713408
        %v833 = vunpack.c.0.s8 %v832
        %v834 = vperm.slane %v826, %v833
        %v835 = vrot.slane %v806, 4
        %v836 = vsel %vm651, %v835, %v794
        %v837 = vrot.slane %v794, 4
        %v838 = vsel %vm651, %v806, %v837
        %v840 = vunpack.c.l.s4 1934713408
        %v841 = vunpack.c.0.s8 %v840
        %v842 = vperm.slane %v836, %v841
        %v844 = vunpack.c.l.s4 1934713408
        %v845 = vunpack.c.0.s8 %v844
        %v846 = vperm.slane %v838, %v845
        %v847 = vrot.slane %v810, 4
        %v848 = vsel %vm651, %v847, %v798
        %v849 = vrot.slane %v798, 4
        %v850 = vsel %vm651, %v810, %v849
        %v852 = vunpack.c.l.s4 1934713408
        %v853 = vunpack.c.0.s8 %v852
        %v854 = vperm.slane %v848, %v853
        %v856 = vunpack.c.l.s4 1934713408
        %v857 = vunpack.c.0.s8 %v856
        %v858 = vperm.slane %v850, %v857
        %v859 = vrot.slane %v842, 4
        %v860 = vsel %vm651, %v859, %v818
        %v861 = vrot.slane %v818, 4
        %v862 = vsel %vm651, %v842, %v861
        %v863 = vrot.slane %v846, 4
        %v864 = vsel %vm651, %v863, %v822
        %v865 = vrot.slane %v822, 4
        %v866 = vsel %vm651, %v846, %v865
        %v867 = vrot.slane %v854, 4
        %v868 = vsel %vm651, %v867, %v830
        %v869 = vrot.slane %v830, 4
        %v870 = vsel %vm651, %v854, %v869
        %v871 = vrot.slane %v858, 4
        %v872 = vsel %vm651, %v871, %v834
        %v873 = vrot.slane %v834, 4
        %v874 = vsel %vm651, %v858, %v873
        %v875 = vrot.slane %v623, 4
        %v876 = vsel %vm651, %v875, %v619
        %v877 = vrot.slane %v619, 4
        %v878 = vsel %vm651, %v623, %v877
        %v880 = vunpack.c.l.s4 1983009808
        %v881 = vunpack.c.0.s8 %v880
        %v882 = vperm.slane %v876, %v881
        %v884 = vunpack.c.l.s4 1983009808
        %v885 = vunpack.c.0.s8 %v884
        %v886 = vperm.slane %v878, %v885
        %v887 = vrot.slane %v625, 4
        %v888 = vsel %vm651, %v887, %v621
        %v889 = vrot.slane %v621, 4
        %v890 = vsel %vm651, %v625, %v889
        %v892 = vunpack.c.l.s4 1983009808
        %v893 = vunpack.c.0.s8 %v892
        %v894 = vperm.slane %v888, %v893
        %v896 = vunpack.c.l.s4 1983009808
        %v897 = vunpack.c.0.s8 %v896
        %v898 = vperm.slane %v890, %v897
        %v899 = vrot.slane %v631, 4
        %v900 = vsel %vm651, %v899, %v627
        %v901 = vrot.slane %v627, 4
        %v902 = vsel %vm651, %v631, %v901
        %v904 = vunpack.c.l.s4 1983009808
        %v905 = vunpack.c.0.s8 %v904
        %v906 = vperm.slane %v900, %v905
        %v908 = vunpack.c.l.s4 1983009808
        %v909 = vunpack.c.0.s8 %v908
        %v910 = vperm.slane %v902, %v909
        %v911 = vrot.slane %v633, 4
        %v912 = vsel %vm651, %v911, %v629
        %v913 = vrot.slane %v629, 4
        %v914 = vsel %vm651, %v633, %v913
        %v916 = vunpack.c.l.s4 1983009808
        %v917 = vunpack.c.0.s8 %v916
        %v918 = vperm.slane %v912, %v917
        %v920 = vunpack.c.l.s4 1983009808
        %v921 = vunpack.c.0.s8 %v920
        %v922 = vperm.slane %v914, %v921
        %v923 = vrot.slane %v894, 4
        %v924 = vsel %vm651, %v923, %v882
        %v925 = vrot.slane %v882, 4
        %v926 = vsel %vm651, %v894, %v925
        %v928 = vunpack.c.l.s4 1934713408
        %v929 = vunpack.c.0.s8 %v928
        %v930 = vperm.slane %v924, %v929
        %v932 = vunpack.c.l.s4 1934713408
        %v933 = vunpack.c.0.s8 %v932
        %v934 = vperm.slane %v926, %v933
        %v935 = vrot.slane %v898, 4
        %v936 = vsel %vm651, %v935, %v886
        %v937 = vrot.slane %v886, 4
        %v938 = vsel %vm651, %v898, %v937
        %v940 = vunpack.c.l.s4 1934713408
        %v941 = vunpack.c.0.s8 %v940
        %v942 = vperm.slane %v936, %v941
        %v944 = vunpack.c.l.s4 1934713408
        %v945 = vunpack.c.0.s8 %v944
        %v946 = vperm.slane %v938, %v945
        %v947 = vrot.slane %v918, 4
        %v948 = vsel %vm651, %v947, %v906
        %v949 = vrot.slane %v906, 4
        %v950 = vsel %vm651, %v918, %v949
        %v952 = vunpack.c.l.s4 1934713408
        %v953 = vunpack.c.0.s8 %v952
        %v954 = vperm.slane %v948, %v953
        %v956 = vunpack.c.l.s4 1934713408
        %v957 = vunpack.c.0.s8 %v956
        %v958 = vperm.slane %v950, %v957
        %v959 = vrot.slane %v922, 4
        %v960 = vsel %vm651, %v959, %v910
        %v961 = vrot.slane %v910, 4
        %v962 = vsel %vm651, %v922, %v961
        %v964 = vunpack.c.l.s4 1934713408
        %v965 = vunpack.c.0.s8 %v964
        %v966 = vperm.slane %v960, %v965
        %v968 = vunpack.c.l.s4 1934713408
        %v969 = vunpack.c.0.s8 %v968
        %v970 = vperm.slane %v962, %v969
        %v971 = vrot.slane %v954, 4
        %v972 = vsel %vm651, %v971, %v930
        %v973 = vrot.slane %v930, 4
        %v974 = vsel %vm651, %v954, %v973
        %v975 = vrot.slane %v958, 4
        %v976 = vsel %vm651, %v975, %v934
        %v977 = vrot.slane %v934, 4
        %v978 = vsel %vm651, %v958, %v977
        %v979 = vrot.slane %v966, 4
        %v980 = vsel %vm651, %v979, %v942
        %v981 = vrot.slane %v942, 4
        %v982 = vsel %vm651, %v966, %v981
        %v983 = vrot.slane %v970, 4
        %v984 = vsel %vm651, %v983, %v946
        %v985 = vrot.slane %v946, 4
        %v986 = vsel %vm651, %v970, %v985
        %v987 = vrot.slane %v639, 4
        %v988 = vsel %vm651, %v987, %v635
        %v989 = vrot.slane %v635, 4
        %v990 = vsel %vm651, %v639, %v989
        %v992 = vunpack.c.l.s4 1983009808
        %v993 = vunpack.c.0.s8 %v992
        %v994 = vperm.slane %v988, %v993
        %v996 = vunpack.c.l.s4 1983009808
        %v997 = vunpack.c.0.s8 %v996
        %v998 = vperm.slane %v990, %v997
        %v999 = vrot.slane %v641, 4
        %v1000 = vsel %vm651, %v999, %v637
        %v1001 = vrot.slane %v637, 4
        %v1002 = vsel %vm651, %v641, %v1001
        %v1004 = vunpack.c.l.s4 1983009808
        %v1005 = vunpack.c.0.s8 %v1004
        %v1006 = vperm.slane %v1000, %v1005
        %v1008 = vunpack.c.l.s4 1983009808
        %v1009 = vunpack.c.0.s8 %v1008
        %v1010 = vperm.slane %v1002, %v1009
        %v1011 = vrot.slane %v647, 4
        %v1012 = vsel %vm651, %v1011, %v643
        %v1013 = vrot.slane %v643, 4
        %v1014 = vsel %vm651, %v647, %v1013
        %v1016 = vunpack.c.l.s4 1983009808
        %v1017 = vunpack.c.0.s8 %v1016
        %v1018 = vperm.slane %v1012, %v1017
        %v1020 = vunpack.c.l.s4 1983009808
        %v1021 = vunpack.c.0.s8 %v1020
        %v1022 = vperm.slane %v1014, %v1021
        %v1023 = vrot.slane %v649, 4
        %v1024 = vsel %vm651, %v1023, %v645
        %v1025 = vrot.slane %v645, 4
        %v1026 = vsel %vm651, %v649, %v1025
        %v1028 = vunpack.c.l.s4 1983009808
        %v1029 = vunpack.c.0.s8 %v1028
        %v1030 = vperm.slane %v1024, %v1029
        %v1032 = vunpack.c.l.s4 1983009808
        %v1033 = vunpack.c.0.s8 %v1032
        %v1034 = vperm.slane %v1026, %v1033
        %v1035 = vrot.slane %v1006, 4
        %v1036 = vsel %vm651, %v1035, %v994
        %v1037 = vrot.slane %v994, 4
        %v1038 = vsel %vm651, %v1006, %v1037
        %v1040 = vunpack.c.l.s4 1934713408
        %v1041 = vunpack.c.0.s8 %v1040
        %v1042 = vperm.slane %v1036, %v1041
        %v1044 = vunpack.c.l.s4 1934713408
        %v1045 = vunpack.c.0.s8 %v1044
        %v1046 = vperm.slane %v1038, %v1045
        %v1047 = vrot.slane %v1010, 4
        %v1048 = vsel %vm651, %v1047, %v998
        %v1049 = vrot.slane %v998, 4
        %v1050 = vsel %vm651, %v1010, %v1049
        %v1052 = vunpack.c.l.s4 1934713408
        %v1053 = vunpack.c.0.s8 %v1052
        %v1054 = vperm.slane %v1048, %v1053
        %v1056 = vunpack.c.l.s4 1934713408
        %v1057 = vunpack.c.0.s8 %v1056
        %v1058 = vperm.slane %v1050, %v1057
        %v1059 = vrot.slane %v1030, 4
        %v1060 = vsel %vm651, %v1059, %v1018
        %v1061 = vrot.slane %v1018, 4
        %v1062 = vsel %vm651, %v1030, %v1061
        %v1064 = vunpack.c.l.s4 1934713408
        %v1065 = vunpack.c.0.s8 %v1064
        %v1066 = vperm.slane %v1060, %v1065
        %v1068 = vunpack.c.l.s4 1934713408
        %v1069 = vunpack.c.0.s8 %v1068
        %v1070 = vperm.slane %v1062, %v1069
        %v1071 = vrot.slane %v1034, 4
        %v1072 = vsel %vm651, %v1071, %v1022
        %v1073 = vrot.slane %v1022, 4
        %v1074 = vsel %vm651, %v1034, %v1073
        %v1076 = vunpack.c.l.s4 1934713408
        %v1077 = vunpack.c.0.s8 %v1076
        %v1078 = vperm.slane %v1072, %v1077
        %v1080 = vunpack.c.l.s4 1934713408
        %v1081 = vunpack.c.0.s8 %v1080
        %v1082 = vperm.slane %v1074, %v1081
        %v1083 = vrot.slane %v1066, 4
        %v1084 = vsel %vm651, %v1083, %v1042
        %v1085 = vrot.slane %v1042, 4
        %v1086 = vsel %vm651, %v1066, %v1085
        %v1087 = vrot.slane %v1070, 4
        %v1088 = vsel %vm651, %v1087, %v1046
        %v1089 = vrot.slane %v1046, 4
        %v1090 = vsel %vm651, %v1070, %v1089
        %v1091 = vrot.slane %v1078, 4
        %v1092 = vsel %vm651, %v1091, %v1054
        %v1093 = vrot.slane %v1054, 4
        %v1094 = vsel %vm651, %v1078, %v1093
        %v1095 = vrot.slane %v1082, 4
        %v1096 = vsel %vm651, %v1095, %v1058
        %v1097 = vrot.slane %v1058, 4
        %v1098 = vsel %vm651, %v1082, %v1097
        %1101 = vrot.lane.b32.xlu0 %v750, 2
        %v1102 = vpop.permute.xlu0 %1101
        %1103 = vrot.lane.b32.xlu0 %v862, 2
        %v1104 = vpop.permute.xlu0 %1103
        %1109 = vrot.lane.b32.xlu0 %v752, 4
        %v1110 = vpop.permute.xlu0 %1109
        %1111 = vrot.lane.b32.xlu0 %v864, 4
        %v1112 = vpop.permute.xlu0 %1111
        %1117 = vrot.lane.b32.xlu0 %v754, 6
        %v1118 = vpop.permute.xlu0 %1117
        %1119 = vrot.lane.b32.xlu0 %v866, 6
        %v1120 = vpop.permute.xlu0 %1119
        %1125 = vrot.lane.b32.xlu0 %v756, 8
        %v1126 = vpop.permute.xlu0 %1125
        %1127 = vrot.lane.b32.xlu0 %v868, 8
        %v1128 = vpop.permute.xlu0 %1127
        %1133 = vrot.lane.b32.xlu0 %v758, 10
        %v1134 = vpop.permute.xlu0 %1133
        %1135 = vrot.lane.b32.xlu0 %v870, 10
        %v1136 = vpop.permute.xlu0 %1135
        %1141 = vrot.lane.b32.xlu0 %v760, 12
        %v1142 = vpop.permute.xlu0 %1141
        %1143 = vrot.lane.b32.xlu0 %v872, 12
        %v1144 = vpop.permute.xlu0 %1143
        %1149 = vrot.lane.b32.xlu0 %v762, 14
        %v1150 = vpop.permute.xlu0 %1149
        %1151 = vrot.lane.b32.xlu0 %v874, 14
        %v1152 = vpop.permute.xlu0 %1151
        %1157 = vrot.lane.b32.xlu0 %v972, 16
        %v1158 = vpop.permute.xlu0 %1157
        %1159 = vrot.lane.b32.xlu0 %v1084, 16
        %v1160 = vpop.permute.xlu0 %1159
        %1165 = vrot.lane.b32.xlu0 %v974, 18
        %v1166 = vpop.permute.xlu0 %1165
        %1167 = vrot.lane.b32.xlu0 %v1086, 18
        %v1168 = vpop.permute.xlu0 %1167
        %1173 = vrot.lane.b32.xlu0 %v976, 20
        %v1174 = vpop.permute.xlu0 %1173
        %1175 = vrot.lane.b32.xlu0 %v1088, 20
        %v1176 = vpop.permute.xlu0 %1175
        %1181 = vrot.lane.b32.xlu0 %v978, 22
        %v1182 = vpop.permute.xlu0 %1181
        %1183 = vrot.lane.b32.xlu0 %v1090, 22
        %v1184 = vpop.permute.xlu0 %1183
        %1189 = vrot.lane.b32.xlu0 %v980, 24
        %v1190 = vpop.permute.xlu0 %1189
        %1191 = vrot.lane.b32.xlu0 %v1092, 24
        %v1192 = vpop.permute.xlu0 %1191
        %1197 = vrot.lane.b32.xlu0 %v982, 26
        %v1198 = vpop.permute.xlu0 %1197
        %1199 = vrot.lane.b32.xlu0 %v1094, 26
        %v1200 = vpop.permute.xlu0 %1199
        %1205 = vrot.lane.b32.xlu0 %v984, 28
        %v1206 = vpop.permute.xlu0 %1205
        %1207 = vrot.lane.b32.xlu0 %v1096, 28
        %v1208 = vpop.permute.xlu0 %1207
        %1213 = vrot.lane.b32.xlu0 %v986, 30
        %v1214 = vpop.permute.xlu0 %1213
        %1215 = vrot.lane.b32.xlu0 %v1098, 30
        %v1216 = vpop.permute.xlu0 %1215
        %vm1219 = vcmask 15360
        %v1220 = vsel %vm1219, %v748, %v1102
        %v1221 = vsel %vm1219, %v860, %v1104
        %vm1222 = vcmask 31744
        %v1223 = vsel %vm1222, %v1220, %v1110
        %v1224 = vsel %vm1222, %v1221, %v1112
        %vm1225 = vcmask 48128
        %v1226 = vsel %vm1225, %v1223, %v1118
        %v1227 = vsel %vm1225, %v1224, %v1120
        %vm1228 = vcmask 64512
        %v1229 = vsel %vm1228, %v1226, %v1126
        %v1230 = vsel %vm1228, %v1227, %v1128
        %vm1231 = vcmask 80896
        %v1232 = vsel %vm1231, %v1229, %v1134
        %v1233 = vsel %vm1231, %v1230, %v1136
        %vm1234 = vcmask 97280
        %v1235 = vsel %vm1234, %v1232, %v1142
        %v1236 = vsel %vm1234, %v1233, %v1144
        %vm1237 = vcmask 113664
        %v1238 = vsel %vm1237, %v1235, %v1150
        %v1239 = vsel %vm1237, %v1236, %v1152
        %vm1240 = vcmask 130048
        %v1241 = vsel %vm1240, %v1238, %v1158
        %v1242 = vsel %vm1240, %v1239, %v1160
        %vm1243 = vcmask 146432
        %v1244 = vsel %vm1243, %v1241, %v1166
        %v1245 = vsel %vm1243, %v1242, %v1168
        %vm1246 = vcmask 162816
        %v1247 = vsel %vm1246, %v1244, %v1174
        %v1248 = vsel %vm1246, %v1245, %v1176
        %vm1249 = vcmask 179200
        %v1250 = vsel %vm1249, %v1247, %v1182
        %v1251 = vsel %vm1249, %v1248, %v1184
        %vm1252 = vcmask 195584
        %v1253 = vsel %vm1252, %v1250, %v1190
        %v1254 = vsel %vm1252, %v1251, %v1192
        %vm1255 = vcmask 211968
        %v1256 = vsel %vm1255, %v1253, %v1198
        %v1257 = vsel %vm1255, %v1254, %v1200
        %vm1258 = vcmask 228352
        %v1259 = vsel %vm1258, %v1256, %v1206
        %v1260 = vsel %vm1258, %v1257, %v1208
        %vm1261 = vcmask 244736
        %v1262 = vsel %vm1261, %v1259, %v1214
        %v1263 = vsel %vm1261, %v1260, %v1216
        %vm1264 = vcmask 261120
        %1265 = vst.msk [vmem:[%s167] sm:$0xff] %vm1264, %v1262
        %1266 = vst.msk [vmem:[%s167 + $0x8] sm:$0xff] %vm1264, %v1263
        %v1267 = vsub.f32 %v187, %v195
        %v1268 = vsub.f32 %v188, %v196
        %v1269 = vadd.f32 %v183, %v191
        %v1270 = vadd.f32 %v184, %v192
        %v1271 = vperm.slane %v1267, 0
        %v1272 = vlaneseq
        %v1273 = vshrl.u32 %v1272, 7
        %1275 = vset.pattern.permute.xlu0 %v1273
        %1276 = vperm.xlu0 %1275, %v1271
        %v1277 = vpop.permute.xlu0 %1276
        %v1278 = vlaneseq
        %v1279 = vshrl.u32 %v1278, 7
        %v1280 = vadd.s32 %v1279, 8
        %1281 = vset.pattern.permute.xlu0 %v1280
        %1282 = vperm.xlu0 %1281, %v1271
        %v1283 = vpop.permute.xlu0 %1282
        %v1284 = vperm.slane %v1267, 1
        %v1285 = vlaneseq
        %v1286 = vshrl.u32 %v1285, 7
        %1288 = vset.pattern.permute.xlu0 %v1286
        %1289 = vperm.xlu0 %1288, %v1284
        %v1290 = vpop.permute.xlu0 %1289
        %v1291 = vlaneseq
        %v1292 = vshrl.u32 %v1291, 7
        %v1293 = vadd.s32 %v1292, 8
        %1294 = vset.pattern.permute.xlu0 %v1293
        %1295 = vperm.xlu0 %1294, %v1284
        %v1296 = vpop.permute.xlu0 %1295
        %v1297 = vperm.slane %v1267, 2
        %v1298 = vlaneseq
        %v1299 = vshrl.u32 %v1298, 7
        %1301 = vset.pattern.permute.xlu0 %v1299
        %1302 = vperm.xlu0 %1301, %v1297
        %v1303 = vpop.permute.xlu0 %1302
        %v1304 = vlaneseq
        %v1305 = vshrl.u32 %v1304, 7
        %v1306 = vadd.s32 %v1305, 8
        %1307 = vset.pattern.permute.xlu0 %v1306
        %1308 = vperm.xlu0 %1307, %v1297
        %v1309 = vpop.permute.xlu0 %1308
        %v1310 = vperm.slane %v1267, 3
        %v1311 = vlaneseq
        %v1312 = vshrl.u32 %v1311, 7
        %1314 = vset.pattern.permute.xlu0 %v1312
        %1315 = vperm.xlu0 %1314, %v1310
        %v1316 = vpop.permute.xlu0 %1315
        %v1317 = vlaneseq
        %v1318 = vshrl.u32 %v1317, 7
        %v1319 = vadd.s32 %v1318, 8
        %1320 = vset.pattern.permute.xlu0 %v1319
        %1321 = vperm.xlu0 %1320, %v1310
        %v1322 = vpop.permute.xlu0 %1321
        %v1323 = vperm.slane %v1267, 4
        %v1324 = vlaneseq
        %v1325 = vshrl.u32 %v1324, 7
        %1327 = vset.pattern.permute.xlu0 %v1325
        %1328 = vperm.xlu0 %1327, %v1323
        %v1329 = vpop.permute.xlu0 %1328
        %v1330 = vlaneseq
        %v1331 = vshrl.u32 %v1330, 7
        %v1332 = vadd.s32 %v1331, 8
        %1333 = vset.pattern.permute.xlu0 %v1332
        %1334 = vperm.xlu0 %1333, %v1323
        %v1335 = vpop.permute.xlu0 %1334
        %v1336 = vperm.slane %v1267, 5
        %v1337 = vlaneseq
        %v1338 = vshrl.u32 %v1337, 7
        %1340 = vset.pattern.permute.xlu0 %v1338
        %1341 = vperm.xlu0 %1340, %v1336
        %v1342 = vpop.permute.xlu0 %1341
        %v1343 = vlaneseq
        %v1344 = vshrl.u32 %v1343, 7
        %v1345 = vadd.s32 %v1344, 8
        %1346 = vset.pattern.permute.xlu0 %v1345
        %1347 = vperm.xlu0 %1346, %v1336
        %v1348 = vpop.permute.xlu0 %1347
        %v1349 = vperm.slane %v1267, 6
        %v1350 = vlaneseq
        %v1351 = vshrl.u32 %v1350, 7
        %1353 = vset.pattern.permute.xlu0 %v1351
        %1354 = vperm.xlu0 %1353, %v1349
        %v1355 = vpop.permute.xlu0 %1354
        %v1356 = vlaneseq
        %v1357 = vshrl.u32 %v1356, 7
        %v1358 = vadd.s32 %v1357, 8
        %1359 = vset.pattern.permute.xlu0 %v1358
        %1360 = vperm.xlu0 %1359, %v1349
        %v1361 = vpop.permute.xlu0 %1360
        %v1362 = vperm.slane %v1267, 7
        %v1363 = vlaneseq
        %v1364 = vshrl.u32 %v1363, 7
        %1366 = vset.pattern.permute.xlu0 %v1364
        %1367 = vperm.xlu0 %1366, %v1362
        %v1368 = vpop.permute.xlu0 %1367
        %v1369 = vlaneseq
        %v1370 = vshrl.u32 %v1369, 7
        %v1371 = vadd.s32 %v1370, 8
        %1372 = vset.pattern.permute.xlu0 %v1371
        %1373 = vperm.xlu0 %1372, %v1362
        %v1374 = vpop.permute.xlu0 %1373
        %v1375 = vperm.slane %v1268, 0
        %v1376 = vlaneseq
        %v1377 = vshrl.u32 %v1376, 7
        %1379 = vset.pattern.permute.xlu0 %v1377
        %1380 = vperm.xlu0 %1379, %v1375
        %v1381 = vpop.permute.xlu0 %1380
        %v1382 = vlaneseq
        %v1383 = vshrl.u32 %v1382, 7
        %v1384 = vadd.s32 %v1383, 8
        %1385 = vset.pattern.permute.xlu0 %v1384
        %1386 = vperm.xlu0 %1385, %v1375
        %v1387 = vpop.permute.xlu0 %1386
        %v1388 = vperm.slane %v1268, 1
        %v1389 = vlaneseq
        %v1390 = vshrl.u32 %v1389, 7
        %1392 = vset.pattern.permute.xlu0 %v1390
        %1393 = vperm.xlu0 %1392, %v1388
        %v1394 = vpop.permute.xlu0 %1393
        %v1395 = vlaneseq
        %v1396 = vshrl.u32 %v1395, 7
        %v1397 = vadd.s32 %v1396, 8
        %1398 = vset.pattern.permute.xlu0 %v1397
        %1399 = vperm.xlu0 %1398, %v1388
        %v1400 = vpop.permute.xlu0 %1399
        %v1401 = vperm.slane %v1268, 2
        %v1402 = vlaneseq
        %v1403 = vshrl.u32 %v1402, 7
        %1405 = vset.pattern.permute.xlu0 %v1403
        %1406 = vperm.xlu0 %1405, %v1401
        %v1407 = vpop.permute.xlu0 %1406
        %v1408 = vlaneseq
        %v1409 = vshrl.u32 %v1408, 7
        %v1410 = vadd.s32 %v1409, 8
        %1411 = vset.pattern.permute.xlu0 %v1410
        %1412 = vperm.xlu0 %1411, %v1401
        %v1413 = vpop.permute.xlu0 %1412
        %v1414 = vperm.slane %v1268, 3
        %v1415 = vlaneseq
        %v1416 = vshrl.u32 %v1415, 7
        %1418 = vset.pattern.permute.xlu0 %v1416
        %1419 = vperm.xlu0 %1418, %v1414
        %v1420 = vpop.permute.xlu0 %1419
        %v1421 = vlaneseq
        %v1422 = vshrl.u32 %v1421, 7
        %v1423 = vadd.s32 %v1422, 8
        %1424 = vset.pattern.permute.xlu0 %v1423
        %1425 = vperm.xlu0 %1424, %v1414
        %v1426 = vpop.permute.xlu0 %1425
        %v1427 = vperm.slane %v1268, 4
        %v1428 = vlaneseq
        %v1429 = vshrl.u32 %v1428, 7
        %1431 = vset.pattern.permute.xlu0 %v1429
        %1432 = vperm.xlu0 %1431, %v1427
        %v1433 = vpop.permute.xlu0 %1432
        %v1434 = vlaneseq
        %v1435 = vshrl.u32 %v1434, 7
        %v1436 = vadd.s32 %v1435, 8
        %1437 = vset.pattern.permute.xlu0 %v1436
        %1438 = vperm.xlu0 %1437, %v1427
        %v1439 = vpop.permute.xlu0 %1438
        %v1440 = vperm.slane %v1268, 5
        %v1441 = vlaneseq
        %v1442 = vshrl.u32 %v1441, 7
        %1444 = vset.pattern.permute.xlu0 %v1442
        %1445 = vperm.xlu0 %1444, %v1440
        %v1446 = vpop.permute.xlu0 %1445
        %v1447 = vlaneseq
        %v1448 = vshrl.u32 %v1447, 7
        %v1449 = vadd.s32 %v1448, 8
        %1450 = vset.pattern.permute.xlu0 %v1449
        %1451 = vperm.xlu0 %1450, %v1440
        %v1452 = vpop.permute.xlu0 %1451
        %v1453 = vperm.slane %v1268, 6
        %v1454 = vlaneseq
        %v1455 = vshrl.u32 %v1454, 7
        %1457 = vset.pattern.permute.xlu0 %v1455
        %1458 = vperm.xlu0 %1457, %v1453
        %v1459 = vpop.permute.xlu0 %1458
        %v1460 = vlaneseq
        %v1461 = vshrl.u32 %v1460, 7
        %v1462 = vadd.s32 %v1461, 8
        %1463 = vset.pattern.permute.xlu0 %v1462
        %1464 = vperm.xlu0 %1463, %v1453
        %v1465 = vpop.permute.xlu0 %1464
        %v1466 = vperm.slane %v1268, 7
        %v1467 = vlaneseq
        %v1468 = vshrl.u32 %v1467, 7
        %1470 = vset.pattern.permute.xlu0 %v1468
        %1471 = vperm.xlu0 %1470, %v1466
        %v1472 = vpop.permute.xlu0 %1471
        %v1473 = vlaneseq
        %v1474 = vshrl.u32 %v1473, 7
        %v1475 = vadd.s32 %v1474, 8
        %1476 = vset.pattern.permute.xlu0 %v1475
        %1477 = vperm.xlu0 %1476, %v1466
        %v1478 = vpop.permute.xlu0 %1477
        %v1479 = vperm.slane %v1269, 0
        %v1480 = vlaneseq
        %v1481 = vshrl.u32 %v1480, 7
        %1483 = vset.pattern.permute.xlu0 %v1481
        %1484 = vperm.xlu0 %1483, %v1479
        %v1485 = vpop.permute.xlu0 %1484
        %v1486 = vlaneseq
        %v1487 = vshrl.u32 %v1486, 7
        %v1488 = vadd.s32 %v1487, 8
        %1489 = vset.pattern.permute.xlu0 %v1488
        %1490 = vperm.xlu0 %1489, %v1479
        %v1491 = vpop.permute.xlu0 %1490
        %v1492 = vperm.slane %v1269, 1
        %v1493 = vlaneseq
        %v1494 = vshrl.u32 %v1493, 7
        %1496 = vset.pattern.permute.xlu0 %v1494
        %1497 = vperm.xlu0 %1496, %v1492
        %v1498 = vpop.permute.xlu0 %1497
        %v1499 = vlaneseq
        %v1500 = vshrl.u32 %v1499, 7
        %v1501 = vadd.s32 %v1500, 8
        %1502 = vset.pattern.permute.xlu0 %v1501
        %1503 = vperm.xlu0 %1502, %v1492
        %v1504 = vpop.permute.xlu0 %1503
        %v1505 = vperm.slane %v1269, 2
        %v1506 = vlaneseq
        %v1507 = vshrl.u32 %v1506, 7
        %1509 = vset.pattern.permute.xlu0 %v1507
        %1510 = vperm.xlu0 %1509, %v1505
        %v1511 = vpop.permute.xlu0 %1510
        %v1512 = vlaneseq
        %v1513 = vshrl.u32 %v1512, 7
        %v1514 = vadd.s32 %v1513, 8
        %1515 = vset.pattern.permute.xlu0 %v1514
        %1516 = vperm.xlu0 %1515, %v1505
        %v1517 = vpop.permute.xlu0 %1516
        %v1518 = vperm.slane %v1269, 3
        %v1519 = vlaneseq
        %v1520 = vshrl.u32 %v1519, 7
        %1522 = vset.pattern.permute.xlu0 %v1520
        %1523 = vperm.xlu0 %1522, %v1518
        %v1524 = vpop.permute.xlu0 %1523
        %v1525 = vlaneseq
        %v1526 = vshrl.u32 %v1525, 7
        %v1527 = vadd.s32 %v1526, 8
        %1528 = vset.pattern.permute.xlu0 %v1527
        %1529 = vperm.xlu0 %1528, %v1518
        %v1530 = vpop.permute.xlu0 %1529
        %v1531 = vperm.slane %v1269, 4
        %v1532 = vlaneseq
        %v1533 = vshrl.u32 %v1532, 7
        %1535 = vset.pattern.permute.xlu0 %v1533
        %1536 = vperm.xlu0 %1535, %v1531
        %v1537 = vpop.permute.xlu0 %1536
        %v1538 = vlaneseq
        %v1539 = vshrl.u32 %v1538, 7
        %v1540 = vadd.s32 %v1539, 8
        %1541 = vset.pattern.permute.xlu0 %v1540
        %1542 = vperm.xlu0 %1541, %v1531
        %v1543 = vpop.permute.xlu0 %1542
        %v1544 = vperm.slane %v1269, 5
        %v1545 = vlaneseq
        %v1546 = vshrl.u32 %v1545, 7
        %1548 = vset.pattern.permute.xlu0 %v1546
        %1549 = vperm.xlu0 %1548, %v1544
        %v1550 = vpop.permute.xlu0 %1549
        %v1551 = vlaneseq
        %v1552 = vshrl.u32 %v1551, 7
        %v1553 = vadd.s32 %v1552, 8
        %1554 = vset.pattern.permute.xlu0 %v1553
        %1555 = vperm.xlu0 %1554, %v1544
        %v1556 = vpop.permute.xlu0 %1555
        %v1557 = vperm.slane %v1269, 6
        %v1558 = vlaneseq
        %v1559 = vshrl.u32 %v1558, 7
        %1561 = vset.pattern.permute.xlu0 %v1559
        %1562 = vperm.xlu0 %1561, %v1557
        %v1563 = vpop.permute.xlu0 %1562
        %v1564 = vlaneseq
        %v1565 = vshrl.u32 %v1564, 7
        %v1566 = vadd.s32 %v1565, 8
        %1567 = vset.pattern.permute.xlu0 %v1566
        %1568 = vperm.xlu0 %1567, %v1557
        %v1569 = vpop.permute.xlu0 %1568
        %v1570 = vperm.slane %v1269, 7
        %v1571 = vlaneseq
        %v1572 = vshrl.u32 %v1571, 7
        %1574 = vset.pattern.permute.xlu0 %v1572
        %1575 = vperm.xlu0 %1574, %v1570
        %v1576 = vpop.permute.xlu0 %1575
        %v1577 = vlaneseq
        %v1578 = vshrl.u32 %v1577, 7
        %v1579 = vadd.s32 %v1578, 8
        %1580 = vset.pattern.permute.xlu0 %v1579
        %1581 = vperm.xlu0 %1580, %v1570
        %v1582 = vpop.permute.xlu0 %1581
        %v1583 = vperm.slane %v1270, 0
        %v1584 = vlaneseq
        %v1585 = vshrl.u32 %v1584, 7
        %1587 = vset.pattern.permute.xlu0 %v1585
        %1588 = vperm.xlu0 %1587, %v1583
        %v1589 = vpop.permute.xlu0 %1588
        %v1590 = vlaneseq
        %v1591 = vshrl.u32 %v1590, 7
        %v1592 = vadd.s32 %v1591, 8
        %1593 = vset.pattern.permute.xlu0 %v1592
        %1594 = vperm.xlu0 %1593, %v1583
        %v1595 = vpop.permute.xlu0 %1594
        %v1596 = vperm.slane %v1270, 1
        %v1597 = vlaneseq
        %v1598 = vshrl.u32 %v1597, 7
        %1600 = vset.pattern.permute.xlu0 %v1598
        %1601 = vperm.xlu0 %1600, %v1596
        %v1602 = vpop.permute.xlu0 %1601
        %v1603 = vlaneseq
        %v1604 = vshrl.u32 %v1603, 7
        %v1605 = vadd.s32 %v1604, 8
        %1606 = vset.pattern.permute.xlu0 %v1605
        %1607 = vperm.xlu0 %1606, %v1596
        %v1608 = vpop.permute.xlu0 %1607
        %v1609 = vperm.slane %v1270, 2
        %v1610 = vlaneseq
        %v1611 = vshrl.u32 %v1610, 7
        %1613 = vset.pattern.permute.xlu0 %v1611
        %1614 = vperm.xlu0 %1613, %v1609
        %v1615 = vpop.permute.xlu0 %1614
        %v1616 = vlaneseq
        %v1617 = vshrl.u32 %v1616, 7
        %v1618 = vadd.s32 %v1617, 8
        %1619 = vset.pattern.permute.xlu0 %v1618
        %1620 = vperm.xlu0 %1619, %v1609
        %v1621 = vpop.permute.xlu0 %1620
        %v1622 = vperm.slane %v1270, 3
        %v1623 = vlaneseq
        %v1624 = vshrl.u32 %v1623, 7
        %1626 = vset.pattern.permute.xlu0 %v1624
        %1627 = vperm.xlu0 %1626, %v1622
        %v1628 = vpop.permute.xlu0 %1627
        %v1629 = vlaneseq
        %v1630 = vshrl.u32 %v1629, 7
        %v1631 = vadd.s32 %v1630, 8
        %1632 = vset.pattern.permute.xlu0 %v1631
        %1633 = vperm.xlu0 %1632, %v1622
        %v1634 = vpop.permute.xlu0 %1633
        %v1635 = vperm.slane %v1270, 4
        %v1636 = vlaneseq
        %v1637 = vshrl.u32 %v1636, 7
        %1639 = vset.pattern.permute.xlu0 %v1637
        %1640 = vperm.xlu0 %1639, %v1635
        %v1641 = vpop.permute.xlu0 %1640
        %v1642 = vlaneseq
        %v1643 = vshrl.u32 %v1642, 7
        %v1644 = vadd.s32 %v1643, 8
        %1645 = vset.pattern.permute.xlu0 %v1644
        %1646 = vperm.xlu0 %1645, %v1635
        %v1647 = vpop.permute.xlu0 %1646
        %v1648 = vperm.slane %v1270, 5
        %v1649 = vlaneseq
        %v1650 = vshrl.u32 %v1649, 7
        %1652 = vset.pattern.permute.xlu0 %v1650
        %1653 = vperm.xlu0 %1652, %v1648
        %v1654 = vpop.permute.xlu0 %1653
        %v1655 = vlaneseq
        %v1656 = vshrl.u32 %v1655, 7
        %v1657 = vadd.s32 %v1656, 8
        %1658 = vset.pattern.permute.xlu0 %v1657
        %1659 = vperm.xlu0 %1658, %v1648
        %v1660 = vpop.permute.xlu0 %1659
        %v1661 = vperm.slane %v1270, 6
        %v1662 = vlaneseq
        %v1663 = vshrl.u32 %v1662, 7
        %1665 = vset.pattern.permute.xlu0 %v1663
        %1666 = vperm.xlu0 %1665, %v1661
        %v1667 = vpop.permute.xlu0 %1666
        %v1668 = vlaneseq
        %v1669 = vshrl.u32 %v1668, 7
        %v1670 = vadd.s32 %v1669, 8
        %1671 = vset.pattern.permute.xlu0 %v1670
        %1672 = vperm.xlu0 %1671, %v1661
        %v1673 = vpop.permute.xlu0 %1672
        %v1674 = vperm.slane %v1270, 7
        %v1675 = vlaneseq
        %v1676 = vshrl.u32 %v1675, 7
        %1678 = vset.pattern.permute.xlu0 %v1676
        %1679 = vperm.xlu0 %1678, %v1674
        %v1680 = vpop.permute.xlu0 %1679
        %v1681 = vlaneseq
        %v1682 = vshrl.u32 %v1681, 7
        %v1683 = vadd.s32 %v1682, 8
        %1684 = vset.pattern.permute.xlu0 %v1683
        %1685 = vperm.xlu0 %1684, %v1674
        %v1686 = vpop.permute.xlu0 %1685
        %v1687 = vsel %vm617, %v1277, %v1485
        %v1688 = vsel %vm617, %v1283, %v1491
        %v1689 = vsel %vm617, %v1290, %v1498
        %v1690 = vsel %vm617, %v1296, %v1504
        %v1691 = vsel %vm617, %v1303, %v1511
        %v1692 = vsel %vm617, %v1309, %v1517
        %v1693 = vsel %vm617, %v1316, %v1524
        %v1694 = vsel %vm617, %v1322, %v1530
        %v1695 = vsel %vm617, %v1329, %v1537
        %v1696 = vsel %vm617, %v1335, %v1543
        %v1697 = vsel %vm617, %v1342, %v1550
        %v1698 = vsel %vm617, %v1348, %v1556
        %v1699 = vsel %vm617, %v1355, %v1563
        %v1700 = vsel %vm617, %v1361, %v1569
        %v1701 = vsel %vm617, %v1368, %v1576
        %v1702 = vsel %vm617, %v1374, %v1582
        %v1703 = vsel %vm617, %v1381, %v1589
        %v1704 = vsel %vm617, %v1387, %v1595
        %v1705 = vsel %vm617, %v1394, %v1602
        %v1706 = vsel %vm617, %v1400, %v1608
        %v1707 = vsel %vm617, %v1407, %v1615
        %v1708 = vsel %vm617, %v1413, %v1621
        %v1709 = vsel %vm617, %v1420, %v1628
        %v1710 = vsel %vm617, %v1426, %v1634
        %v1711 = vsel %vm617, %v1433, %v1641
        %v1712 = vsel %vm617, %v1439, %v1647
        %v1713 = vsel %vm617, %v1446, %v1654
        %v1714 = vsel %vm617, %v1452, %v1660
        %v1715 = vsel %vm617, %v1459, %v1667
        %v1716 = vsel %vm617, %v1465, %v1673
        %v1717 = vsel %vm617, %v1472, %v1680
        %v1718 = vsel %vm617, %v1478, %v1686
        %v1719 = vrot.slane %v1691, 4
        %v1720 = vsel %vm651, %v1719, %v1687
        %v1721 = vrot.slane %v1687, 4
        %v1722 = vsel %vm651, %v1691, %v1721
        %v1724 = vunpack.c.l.s4 1983009808
        %v1725 = vunpack.c.0.s8 %v1724
        %v1726 = vperm.slane %v1720, %v1725
        %v1728 = vunpack.c.l.s4 1983009808
        %v1729 = vunpack.c.0.s8 %v1728
        %v1730 = vperm.slane %v1722, %v1729
        %v1731 = vrot.slane %v1693, 4
        %v1732 = vsel %vm651, %v1731, %v1689
        %v1733 = vrot.slane %v1689, 4
        %v1734 = vsel %vm651, %v1693, %v1733
        %v1736 = vunpack.c.l.s4 1983009808
        %v1737 = vunpack.c.0.s8 %v1736
        %v1738 = vperm.slane %v1732, %v1737
        %v1740 = vunpack.c.l.s4 1983009808
        %v1741 = vunpack.c.0.s8 %v1740
        %v1742 = vperm.slane %v1734, %v1741
        %v1743 = vrot.slane %v1699, 4
        %v1744 = vsel %vm651, %v1743, %v1695
        %v1745 = vrot.slane %v1695, 4
        %v1746 = vsel %vm651, %v1699, %v1745
        %v1748 = vunpack.c.l.s4 1983009808
        %v1749 = vunpack.c.0.s8 %v1748
        %v1750 = vperm.slane %v1744, %v1749
        %v1752 = vunpack.c.l.s4 1983009808
        %v1753 = vunpack.c.0.s8 %v1752
        %v1754 = vperm.slane %v1746, %v1753
        %v1755 = vrot.slane %v1701, 4
        %v1756 = vsel %vm651, %v1755, %v1697
        %v1757 = vrot.slane %v1697, 4
        %v1758 = vsel %vm651, %v1701, %v1757
        %v1760 = vunpack.c.l.s4 1983009808
        %v1761 = vunpack.c.0.s8 %v1760
        %v1762 = vperm.slane %v1756, %v1761
        %v1764 = vunpack.c.l.s4 1983009808
        %v1765 = vunpack.c.0.s8 %v1764
        %v1766 = vperm.slane %v1758, %v1765
        %v1767 = vrot.slane %v1738, 4
        %v1768 = vsel %vm651, %v1767, %v1726
        %v1769 = vrot.slane %v1726, 4
        %v1770 = vsel %vm651, %v1738, %v1769
        %v1772 = vunpack.c.l.s4 1934713408
        %v1773 = vunpack.c.0.s8 %v1772
        %v1774 = vperm.slane %v1768, %v1773
        %v1776 = vunpack.c.l.s4 1934713408
        %v1777 = vunpack.c.0.s8 %v1776
        %v1778 = vperm.slane %v1770, %v1777
        %v1779 = vrot.slane %v1742, 4
        %v1780 = vsel %vm651, %v1779, %v1730
        %v1781 = vrot.slane %v1730, 4
        %v1782 = vsel %vm651, %v1742, %v1781
        %v1784 = vunpack.c.l.s4 1934713408
        %v1785 = vunpack.c.0.s8 %v1784
        %v1786 = vperm.slane %v1780, %v1785
        %v1788 = vunpack.c.l.s4 1934713408
        %v1789 = vunpack.c.0.s8 %v1788
        %v1790 = vperm.slane %v1782, %v1789
        %v1791 = vrot.slane %v1762, 4
        %v1792 = vsel %vm651, %v1791, %v1750
        %v1793 = vrot.slane %v1750, 4
        %v1794 = vsel %vm651, %v1762, %v1793
        %v1796 = vunpack.c.l.s4 1934713408
        %v1797 = vunpack.c.0.s8 %v1796
        %v1798 = vperm.slane %v1792, %v1797
        %v1800 = vunpack.c.l.s4 1934713408
        %v1801 = vunpack.c.0.s8 %v1800
        %v1802 = vperm.slane %v1794, %v1801
        %v1803 = vrot.slane %v1766, 4
        %v1804 = vsel %vm651, %v1803, %v1754
        %v1805 = vrot.slane %v1754, 4
        %v1806 = vsel %vm651, %v1766, %v1805
        %v1808 = vunpack.c.l.s4 1934713408
        %v1809 = vunpack.c.0.s8 %v1808
        %v1810 = vperm.slane %v1804, %v1809
        %v1812 = vunpack.c.l.s4 1934713408
        %v1813 = vunpack.c.0.s8 %v1812
        %v1814 = vperm.slane %v1806, %v1813
        %v1815 = vrot.slane %v1798, 4
        %v1816 = vsel %vm651, %v1815, %v1774
        %v1817 = vrot.slane %v1774, 4
        %v1818 = vsel %vm651, %v1798, %v1817
        %v1819 = vrot.slane %v1802, 4
        %v1820 = vsel %vm651, %v1819, %v1778
        %v1821 = vrot.slane %v1778, 4
        %v1822 = vsel %vm651, %v1802, %v1821
        %v1823 = vrot.slane %v1810, 4
        %v1824 = vsel %vm651, %v1823, %v1786
        %v1825 = vrot.slane %v1786, 4
        %v1826 = vsel %vm651, %v1810, %v1825
        %v1827 = vrot.slane %v1814, 4
        %v1828 = vsel %vm651, %v1827, %v1790
        %v1829 = vrot.slane %v1790, 4
        %v1830 = vsel %vm651, %v1814, %v1829
        %v1831 = vrot.slane %v1707, 4
        %v1832 = vsel %vm651, %v1831, %v1703
        %v1833 = vrot.slane %v1703, 4
        %v1834 = vsel %vm651, %v1707, %v1833
        %v1836 = vunpack.c.l.s4 1983009808
        %v1837 = vunpack.c.0.s8 %v1836
        %v1838 = vperm.slane %v1832, %v1837
        %v1840 = vunpack.c.l.s4 1983009808
        %v1841 = vunpack.c.0.s8 %v1840
        %v1842 = vperm.slane %v1834, %v1841
        %v1843 = vrot.slane %v1709, 4
        %v1844 = vsel %vm651, %v1843, %v1705
        %v1845 = vrot.slane %v1705, 4
        %v1846 = vsel %vm651, %v1709, %v1845
        %v1848 = vunpack.c.l.s4 1983009808
        %v1849 = vunpack.c.0.s8 %v1848
        %v1850 = vperm.slane %v1844, %v1849
        %v1852 = vunpack.c.l.s4 1983009808
        %v1853 = vunpack.c.0.s8 %v1852
        %v1854 = vperm.slane %v1846, %v1853
        %v1855 = vrot.slane %v1715, 4
        %v1856 = vsel %vm651, %v1855, %v1711
        %v1857 = vrot.slane %v1711, 4
        %v1858 = vsel %vm651, %v1715, %v1857
        %v1860 = vunpack.c.l.s4 1983009808
        %v1861 = vunpack.c.0.s8 %v1860
        %v1862 = vperm.slane %v1856, %v1861
        %v1864 = vunpack.c.l.s4 1983009808
        %v1865 = vunpack.c.0.s8 %v1864
        %v1866 = vperm.slane %v1858, %v1865
        %v1867 = vrot.slane %v1717, 4
        %v1868 = vsel %vm651, %v1867, %v1713
        %v1869 = vrot.slane %v1713, 4
        %v1870 = vsel %vm651, %v1717, %v1869
        %v1872 = vunpack.c.l.s4 1983009808
        %v1873 = vunpack.c.0.s8 %v1872
        %v1874 = vperm.slane %v1868, %v1873
        %v1876 = vunpack.c.l.s4 1983009808
        %v1877 = vunpack.c.0.s8 %v1876
        %v1878 = vperm.slane %v1870, %v1877
        %v1879 = vrot.slane %v1850, 4
        %v1880 = vsel %vm651, %v1879, %v1838
        %v1881 = vrot.slane %v1838, 4
        %v1882 = vsel %vm651, %v1850, %v1881
        %v1884 = vunpack.c.l.s4 1934713408
        %v1885 = vunpack.c.0.s8 %v1884
        %v1886 = vperm.slane %v1880, %v1885
        %v1888 = vunpack.c.l.s4 1934713408
        %v1889 = vunpack.c.0.s8 %v1888
        %v1890 = vperm.slane %v1882, %v1889
        %v1891 = vrot.slane %v1854, 4
        %v1892 = vsel %vm651, %v1891, %v1842
        %v1893 = vrot.slane %v1842, 4
        %v1894 = vsel %vm651, %v1854, %v1893
        %v1896 = vunpack.c.l.s4 1934713408
        %v1897 = vunpack.c.0.s8 %v1896
        %v1898 = vperm.slane %v1892, %v1897
        %v1900 = vunpack.c.l.s4 1934713408
        %v1901 = vunpack.c.0.s8 %v1900
        %v1902 = vperm.slane %v1894, %v1901
        %v1903 = vrot.slane %v1874, 4
        %v1904 = vsel %vm651, %v1903, %v1862
        %v1905 = vrot.slane %v1862, 4
        %v1906 = vsel %vm651, %v1874, %v1905
        %v1908 = vunpack.c.l.s4 1934713408
        %v1909 = vunpack.c.0.s8 %v1908
        %v1910 = vperm.slane %v1904, %v1909
        %v1912 = vunpack.c.l.s4 1934713408
        %v1913 = vunpack.c.0.s8 %v1912
        %v1914 = vperm.slane %v1906, %v1913
        %v1915 = vrot.slane %v1878, 4
        %v1916 = vsel %vm651, %v1915, %v1866
        %v1917 = vrot.slane %v1866, 4
        %v1918 = vsel %vm651, %v1878, %v1917
        %v1920 = vunpack.c.l.s4 1934713408
        %v1921 = vunpack.c.0.s8 %v1920
        %v1922 = vperm.slane %v1916, %v1921
        %v1924 = vunpack.c.l.s4 1934713408
        %v1925 = vunpack.c.0.s8 %v1924
        %v1926 = vperm.slane %v1918, %v1925
        %v1927 = vrot.slane %v1910, 4
        %v1928 = vsel %vm651, %v1927, %v1886
        %v1929 = vrot.slane %v1886, 4
        %v1930 = vsel %vm651, %v1910, %v1929
        %v1931 = vrot.slane %v1914, 4
        %v1932 = vsel %vm651, %v1931, %v1890
        %v1933 = vrot.slane %v1890, 4
        %v1934 = vsel %vm651, %v1914, %v1933
        %v1935 = vrot.slane %v1922, 4
        %v1936 = vsel %vm651, %v1935, %v1898
        %v1937 = vrot.slane %v1898, 4
        %v1938 = vsel %vm651, %v1922, %v1937
        %v1939 = vrot.slane %v1926, 4
        %v1940 = vsel %vm651, %v1939, %v1902
        %v1941 = vrot.slane %v1902, 4
        %v1942 = vsel %vm651, %v1926, %v1941
        %v1943 = vrot.slane %v1692, 4
        %v1944 = vsel %vm651, %v1943, %v1688
        %v1945 = vrot.slane %v1688, 4
        %v1946 = vsel %vm651, %v1692, %v1945
        %v1948 = vunpack.c.l.s4 1983009808
        %v1949 = vunpack.c.0.s8 %v1948
        %v1950 = vperm.slane %v1944, %v1949
        %v1952 = vunpack.c.l.s4 1983009808
        %v1953 = vunpack.c.0.s8 %v1952
        %v1954 = vperm.slane %v1946, %v1953
        %v1955 = vrot.slane %v1694, 4
        %v1956 = vsel %vm651, %v1955, %v1690
        %v1957 = vrot.slane %v1690, 4
        %v1958 = vsel %vm651, %v1694, %v1957
        %v1960 = vunpack.c.l.s4 1983009808
        %v1961 = vunpack.c.0.s8 %v1960
        %v1962 = vperm.slane %v1956, %v1961
        %v1964 = vunpack.c.l.s4 1983009808
        %v1965 = vunpack.c.0.s8 %v1964
        %v1966 = vperm.slane %v1958, %v1965
        %v1967 = vrot.slane %v1700, 4
        %v1968 = vsel %vm651, %v1967, %v1696
        %v1969 = vrot.slane %v1696, 4
        %v1970 = vsel %vm651, %v1700, %v1969
        %v1972 = vunpack.c.l.s4 1983009808
        %v1973 = vunpack.c.0.s8 %v1972
        %v1974 = vperm.slane %v1968, %v1973
        %v1976 = vunpack.c.l.s4 1983009808
        %v1977 = vunpack.c.0.s8 %v1976
        %v1978 = vperm.slane %v1970, %v1977
        %v1979 = vrot.slane %v1702, 4
        %v1980 = vsel %vm651, %v1979, %v1698
        %v1981 = vrot.slane %v1698, 4
        %v1982 = vsel %vm651, %v1702, %v1981
        %v1984 = vunpack.c.l.s4 1983009808
        %v1985 = vunpack.c.0.s8 %v1984
        %v1986 = vperm.slane %v1980, %v1985
        %v1988 = vunpack.c.l.s4 1983009808
        %v1989 = vunpack.c.0.s8 %v1988
        %v1990 = vperm.slane %v1982, %v1989
        %v1991 = vrot.slane %v1962, 4
        %v1992 = vsel %vm651, %v1991, %v1950
        %v1993 = vrot.slane %v1950, 4
        %v1994 = vsel %vm651, %v1962, %v1993
        %v1996 = vunpack.c.l.s4 1934713408
        %v1997 = vunpack.c.0.s8 %v1996
        %v1998 = vperm.slane %v1992, %v1997
        %v2000 = vunpack.c.l.s4 1934713408
        %v2001 = vunpack.c.0.s8 %v2000
        %v2002 = vperm.slane %v1994, %v2001
        %v2003 = vrot.slane %v1966, 4
        %v2004 = vsel %vm651, %v2003, %v1954
        %v2005 = vrot.slane %v1954, 4
        %v2006 = vsel %vm651, %v1966, %v2005
        %v2008 = vunpack.c.l.s4 1934713408
        %v2009 = vunpack.c.0.s8 %v2008
        %v2010 = vperm.slane %v2004, %v2009
        %v2012 = vunpack.c.l.s4 1934713408
        %v2013 = vunpack.c.0.s8 %v2012
        %v2014 = vperm.slane %v2006, %v2013
        %v2015 = vrot.slane %v1986, 4
        %v2016 = vsel %vm651, %v2015, %v1974
        %v2017 = vrot.slane %v1974, 4
        %v2018 = vsel %vm651, %v1986, %v2017
        %v2020 = vunpack.c.l.s4 1934713408
        %v2021 = vunpack.c.0.s8 %v2020
        %v2022 = vperm.slane %v2016, %v2021
        %v2024 = vunpack.c.l.s4 1934713408
        %v2025 = vunpack.c.0.s8 %v2024
        %v2026 = vperm.slane %v2018, %v2025
        %v2027 = vrot.slane %v1990, 4
        %v2028 = vsel %vm651, %v2027, %v1978
        %v2029 = vrot.slane %v1978, 4
        %v2030 = vsel %vm651, %v1990, %v2029
        %v2032 = vunpack.c.l.s4 1934713408
        %v2033 = vunpack.c.0.s8 %v2032
        %v2034 = vperm.slane %v2028, %v2033
        %v2036 = vunpack.c.l.s4 1934713408
        %v2037 = vunpack.c.0.s8 %v2036
        %v2038 = vperm.slane %v2030, %v2037
        %v2039 = vrot.slane %v2022, 4
        %v2040 = vsel %vm651, %v2039, %v1998
        %v2041 = vrot.slane %v1998, 4
        %v2042 = vsel %vm651, %v2022, %v2041
        %v2043 = vrot.slane %v2026, 4
        %v2044 = vsel %vm651, %v2043, %v2002
        %v2045 = vrot.slane %v2002, 4
        %v2046 = vsel %vm651, %v2026, %v2045
        %v2047 = vrot.slane %v2034, 4
        %v2048 = vsel %vm651, %v2047, %v2010
        %v2049 = vrot.slane %v2010, 4
        %v2050 = vsel %vm651, %v2034, %v2049
        %v2051 = vrot.slane %v2038, 4
        %v2052 = vsel %vm651, %v2051, %v2014
        %v2053 = vrot.slane %v2014, 4
        %v2054 = vsel %vm651, %v2038, %v2053
        %v2055 = vrot.slane %v1708, 4
        %v2056 = vsel %vm651, %v2055, %v1704
        %v2057 = vrot.slane %v1704, 4
        %v2058 = vsel %vm651, %v1708, %v2057
        %v2060 = vunpack.c.l.s4 1983009808
        %v2061 = vunpack.c.0.s8 %v2060
        %v2062 = vperm.slane %v2056, %v2061
        %v2064 = vunpack.c.l.s4 1983009808
        %v2065 = vunpack.c.0.s8 %v2064
        %v2066 = vperm.slane %v2058, %v2065
        %v2067 = vrot.slane %v1710, 4
        %v2068 = vsel %vm651, %v2067, %v1706
        %v2069 = vrot.slane %v1706, 4
        %v2070 = vsel %vm651, %v1710, %v2069
        %v2072 = vunpack.c.l.s4 1983009808
        %v2073 = vunpack.c.0.s8 %v2072
        %v2074 = vperm.slane %v2068, %v2073
        %v2076 = vunpack.c.l.s4 1983009808
        %v2077 = vunpack.c.0.s8 %v2076
        %v2078 = vperm.slane %v2070, %v2077
        %v2079 = vrot.slane %v1716, 4
        %v2080 = vsel %vm651, %v2079, %v1712
        %v2081 = vrot.slane %v1712, 4
        %v2082 = vsel %vm651, %v1716, %v2081
        %v2084 = vunpack.c.l.s4 1983009808
        %v2085 = vunpack.c.0.s8 %v2084
        %v2086 = vperm.slane %v2080, %v2085
        %v2088 = vunpack.c.l.s4 1983009808
        %v2089 = vunpack.c.0.s8 %v2088
        %v2090 = vperm.slane %v2082, %v2089
        %v2091 = vrot.slane %v1718, 4
        %v2092 = vsel %vm651, %v2091, %v1714
        %v2093 = vrot.slane %v1714, 4
        %v2094 = vsel %vm651, %v1718, %v2093
        %v2096 = vunpack.c.l.s4 1983009808
        %v2097 = vunpack.c.0.s8 %v2096
        %v2098 = vperm.slane %v2092, %v2097
        %v2100 = vunpack.c.l.s4 1983009808
        %v2101 = vunpack.c.0.s8 %v2100
        %v2102 = vperm.slane %v2094, %v2101
        %v2103 = vrot.slane %v2074, 4
        %v2104 = vsel %vm651, %v2103, %v2062
        %v2105 = vrot.slane %v2062, 4
        %v2106 = vsel %vm651, %v2074, %v2105
        %v2108 = vunpack.c.l.s4 1934713408
        %v2109 = vunpack.c.0.s8 %v2108
        %v2110 = vperm.slane %v2104, %v2109
        %v2112 = vunpack.c.l.s4 1934713408
        %v2113 = vunpack.c.0.s8 %v2112
        %v2114 = vperm.slane %v2106, %v2113
        %v2115 = vrot.slane %v2078, 4
        %v2116 = vsel %vm651, %v2115, %v2066
        %v2117 = vrot.slane %v2066, 4
        %v2118 = vsel %vm651, %v2078, %v2117
        %v2120 = vunpack.c.l.s4 1934713408
        %v2121 = vunpack.c.0.s8 %v2120
        %v2122 = vperm.slane %v2116, %v2121
        %v2124 = vunpack.c.l.s4 1934713408
        %v2125 = vunpack.c.0.s8 %v2124
        %v2126 = vperm.slane %v2118, %v2125
        %v2127 = vrot.slane %v2098, 4
        %v2128 = vsel %vm651, %v2127, %v2086
        %v2129 = vrot.slane %v2086, 4
        %v2130 = vsel %vm651, %v2098, %v2129
        %v2132 = vunpack.c.l.s4 1934713408
        %v2133 = vunpack.c.0.s8 %v2132
        %v2134 = vperm.slane %v2128, %v2133
        %v2136 = vunpack.c.l.s4 1934713408
        %v2137 = vunpack.c.0.s8 %v2136
        %v2138 = vperm.slane %v2130, %v2137
        %v2139 = vrot.slane %v2102, 4
        %v2140 = vsel %vm651, %v2139, %v2090
        %v2141 = vrot.slane %v2090, 4
        %v2142 = vsel %vm651, %v2102, %v2141
        %v2144 = vunpack.c.l.s4 1934713408
        %v2145 = vunpack.c.0.s8 %v2144
        %v2146 = vperm.slane %v2140, %v2145
        %v2148 = vunpack.c.l.s4 1934713408
        %v2149 = vunpack.c.0.s8 %v2148
        %v2150 = vperm.slane %v2142, %v2149
        %v2151 = vrot.slane %v2134, 4
        %v2152 = vsel %vm651, %v2151, %v2110
        %v2153 = vrot.slane %v2110, 4
        %v2154 = vsel %vm651, %v2134, %v2153
        %v2155 = vrot.slane %v2138, 4
        %v2156 = vsel %vm651, %v2155, %v2114
        %v2157 = vrot.slane %v2114, 4
        %v2158 = vsel %vm651, %v2138, %v2157
        %v2159 = vrot.slane %v2146, 4
        %v2160 = vsel %vm651, %v2159, %v2122
        %v2161 = vrot.slane %v2122, 4
        %v2162 = vsel %vm651, %v2146, %v2161
        %v2163 = vrot.slane %v2150, 4
        %v2164 = vsel %vm651, %v2163, %v2126
        %v2165 = vrot.slane %v2126, 4
        %v2166 = vsel %vm651, %v2150, %v2165
        %2169 = vrot.lane.b32.xlu0 %v1818, 2
        %v2170 = vpop.permute.xlu0 %2169
        %2171 = vrot.lane.b32.xlu0 %v1930, 2
        %v2172 = vpop.permute.xlu0 %2171
        %2177 = vrot.lane.b32.xlu0 %v1820, 4
        %v2178 = vpop.permute.xlu0 %2177
        %2179 = vrot.lane.b32.xlu0 %v1932, 4
        %v2180 = vpop.permute.xlu0 %2179
        %2185 = vrot.lane.b32.xlu0 %v1822, 6
        %v2186 = vpop.permute.xlu0 %2185
        %2187 = vrot.lane.b32.xlu0 %v1934, 6
        %v2188 = vpop.permute.xlu0 %2187
        %2193 = vrot.lane.b32.xlu0 %v1824, 8
        %v2194 = vpop.permute.xlu0 %2193
        %2195 = vrot.lane.b32.xlu0 %v1936, 8
        %v2196 = vpop.permute.xlu0 %2195
        %2201 = vrot.lane.b32.xlu0 %v1826, 10
        %v2202 = vpop.permute.xlu0 %2201
        %2203 = vrot.lane.b32.xlu0 %v1938, 10
        %v2204 = vpop.permute.xlu0 %2203
        %2209 = vrot.lane.b32.xlu0 %v1828, 12
        %v2210 = vpop.permute.xlu0 %2209
        %2211 = vrot.lane.b32.xlu0 %v1940, 12
        %v2212 = vpop.permute.xlu0 %2211
        %2217 = vrot.lane.b32.xlu0 %v1830, 14
        %v2218 = vpop.permute.xlu0 %2217
        %2219 = vrot.lane.b32.xlu0 %v1942, 14
        %v2220 = vpop.permute.xlu0 %2219
        %2225 = vrot.lane.b32.xlu0 %v2040, 16
        %v2226 = vpop.permute.xlu0 %2225
        %2227 = vrot.lane.b32.xlu0 %v2152, 16
        %v2228 = vpop.permute.xlu0 %2227
        %2233 = vrot.lane.b32.xlu0 %v2042, 18
        %v2234 = vpop.permute.xlu0 %2233
        %2235 = vrot.lane.b32.xlu0 %v2154, 18
        %v2236 = vpop.permute.xlu0 %2235
        %2241 = vrot.lane.b32.xlu0 %v2044, 20
        %v2242 = vpop.permute.xlu0 %2241
        %2243 = vrot.lane.b32.xlu0 %v2156, 20
        %v2244 = vpop.permute.xlu0 %2243
        %2249 = vrot.lane.b32.xlu0 %v2046, 22
        %v2250 = vpop.permute.xlu0 %2249
        %2251 = vrot.lane.b32.xlu0 %v2158, 22
        %v2252 = vpop.permute.xlu0 %2251
        %2257 = vrot.lane.b32.xlu0 %v2048, 24
        %v2258 = vpop.permute.xlu0 %2257
        %2259 = vrot.lane.b32.xlu0 %v2160, 24
        %v2260 = vpop.permute.xlu0 %2259
        %2265 = vrot.lane.b32.xlu0 %v2050, 26
        %v2266 = vpop.permute.xlu0 %2265
        %2267 = vrot.lane.b32.xlu0 %v2162, 26
        %v2268 = vpop.permute.xlu0 %2267
        %2273 = vrot.lane.b32.xlu0 %v2052, 28
        %v2274 = vpop.permute.xlu0 %2273
        %2275 = vrot.lane.b32.xlu0 %v2164, 28
        %v2276 = vpop.permute.xlu0 %2275
        %2281 = vrot.lane.b32.xlu0 %v2054, 30
        %v2282 = vpop.permute.xlu0 %2281
        %2283 = vrot.lane.b32.xlu0 %v2166, 30
        %v2284 = vpop.permute.xlu0 %2283
        %v2287 = vsel %vm1219, %v1816, %v2170
        %v2288 = vsel %vm1219, %v1928, %v2172
        %v2289 = vsel %vm1222, %v2287, %v2178
        %v2290 = vsel %vm1222, %v2288, %v2180
        %v2291 = vsel %vm1225, %v2289, %v2186
        %v2292 = vsel %vm1225, %v2290, %v2188
        %v2293 = vsel %vm1228, %v2291, %v2194
        %v2294 = vsel %vm1228, %v2292, %v2196
        %v2295 = vsel %vm1231, %v2293, %v2202
        %v2296 = vsel %vm1231, %v2294, %v2204
        %v2297 = vsel %vm1234, %v2295, %v2210
        %v2298 = vsel %vm1234, %v2296, %v2212
        %v2299 = vsel %vm1237, %v2297, %v2218
        %v2300 = vsel %vm1237, %v2298, %v2220
        %v2301 = vsel %vm1240, %v2299, %v2226
        %v2302 = vsel %vm1240, %v2300, %v2228
        %v2303 = vsel %vm1243, %v2301, %v2234
        %v2304 = vsel %vm1243, %v2302, %v2236
        %v2305 = vsel %vm1246, %v2303, %v2242
        %v2306 = vsel %vm1246, %v2304, %v2244
        %v2307 = vsel %vm1249, %v2305, %v2250
        %v2308 = vsel %vm1249, %v2306, %v2252
        %v2309 = vsel %vm1252, %v2307, %v2258
        %v2310 = vsel %vm1252, %v2308, %v2260
        %v2311 = vsel %vm1255, %v2309, %v2266
        %v2312 = vsel %vm1255, %v2310, %v2268
        %v2313 = vsel %vm1258, %v2311, %v2274
        %v2314 = vsel %vm1258, %v2312, %v2276
        %v2315 = vsel %vm1261, %v2313, %v2282
        %v2316 = vsel %vm1261, %v2314, %v2284
        %2319 = vrot.lane.b32.xlu0 %v2315, 32
        %v2320 = vpop.permute.xlu0 %2319
        %2321 = vrot.lane.b32.xlu0 %v2316, 32
        %v2322 = vpop.permute.xlu0 %2321
        %vm2325 = vcmask 523520
        %2326 = vst.msk [vmem:[%s167] sm:$0xff] %vm2325, %v2320
        %2327 = vst.msk [vmem:[%s167 + $0x8] sm:$0xff] %vm2325, %v2322
        %s2328 = sand.u32 %s79, 1
        %s2329 = scalar_lea.sflag [#allocation4], %s2328
        %s2330 = sand.u32 %s79, 1
        %s2331 = smul.addr %s2330, 16
        %s2332 = scalar_lea.vmem [#allocation5], %s2331
        // Predicated region
        $region29: #{tpu_custom_call.1} parent=23 // pred_check
          %p2333 = pneg %p89
        $region30: #{tpu_custom_call.1} parent=23 // pred_check_branch
          %2335 = sbr.rel (%p2333) target = $region32
        $region31: #{tpu_custom_call.1} parent=23 // pred_region
          %s2336 = smul.u32 2, %s25
          %2338 = vsyncadd %s2329, 0
          %s2339 = smul.addr %s24, 2
          %s2340 = sadd.s32 %s2336, %s2339
          %s2341 = smul.addr %s23, 2
          %s2342 = sadd.s32 %s2340, %s2341
          %s2343 = smul.addr %s2342, 8
          %s2344 = scalar_lea.hbm %s1, %s2343
          %s2345 = sshll.u32 %s2332, 4
          %s2346 = int_to_ptr.vmem [resolvable:$true] %s2345
          %s2347 = sshll.u32 %s2344, 4
          %s2348 = int_to_ptr.hbm [resolvable:$true] %s2347
          %2353 = dma.vmem_to_hbm [thread:$0]  %s2346, 256, %s2348, %s2329, 128, 128, 8
        $region32: #{tpu_custom_call.1} parent=23 // pred_fallthru
          _
      $region24: #{tpu_custom_call.1} parent=5 // pred_fallthru
        _
      %p2354 = scmp.le.s32.totalorder 2, %s13
      // Predicated region
      $region33: #{tpu_custom_call.1} parent=5 // pred_check
        %p2355 = pneg %p2354
      $region34: #{tpu_custom_call.1} parent=5 // pred_check_branch
        %2357 = sbr.rel (%p2355) target = $region36
      $region35: #{tpu_custom_call.1} parent=5 // pred_region
        %s2358 = ssub.s32 %s13, 2
        // Predicated region
        $region37: #{tpu_custom_call.1} parent=35 // pred_check
          %p2359 = pneg %p95
        $region38: #{tpu_custom_call.1} parent=35 // pred_check_branch
          %2361 = sbr.rel (%p2359) target = $region40
        $region39: #{tpu_custom_call.1} parent=35 // pred_region
          %s2362 = sand.u32 %s80, 1
          %s2363 = scalar_lea.sflag [#allocation4], %s2362
          %s2364 = sand.u32 %s80, 1
          %s2365 = smul.addr %s2364, 16
          %s2366 = scalar_lea.vmem [#allocation5], %s2365
          %2368 = dma.done %s2363, 256
        $region40: #{tpu_custom_call.1} parent=35 // pred_fallthru
          _
      $region36: #{tpu_custom_call.1} parent=5 // pred_fallthru
        _
    $region6: #{tpu_custom_call.1} parent=1 // loop_footer
      %s17 = sadd.s32 1, %s13
    $region7: #{tpu_custom_call.1} parent=1 // loop_footer_branch
      %12 = sbr.rel target = $region3
    $region8: #{tpu_custom_call.1} parent=1 // loop_exit
      _
    %2369 = vsyncpa [#allocation3], 1
    %s2370 = scalar_lea.sflag [#allocation3], 1
    %2371 = vsyncpa %s2370, 1
    %2372 = vsyncpa [#allocation4], 1
    %s2373 = scalar_lea.sflag [#allocation4], 1
    %2374 = vsyncpa %s2373, 1

</llo_original>
